<compile_context>
chip_gen: v7x
topology: tpu7x:2x2x1
jax: 0.10.0
libtpu: 0.0.40
codegen_flags: <defaults>
</compile_context>

<pallas_src>
import math
import functools

import jax
import jax.numpy as jnp
from jax import lax
from jax.experimental import pallas as pl
from jax.experimental.pallas import tpu as pltpu


def _round_up(a, b):
    return (a + b - 1) // b * b


def _subcenter_arcface_kernel(x_ref, w_ref, label_ref, out_ref, *,
                              K, D, tc, s, cos_m, sin_m, th, mm,
                              easy_margin, ls_eps, out_features, compute_dtype):
    """One grid step: classes [j*tc, (j+1)*tc).

    x_ref     : (B, D)      f32   -- full batch, resident every step
    w_ref     : (tc, K*D)   f32   -- weight tile; row c holds the K sub-center
                                     vectors of class (j*tc + c) back to back
                                     (original row c*K + k -> lanes [k*D,(k+1)*D))
    label_ref : (B, 1)      i32
    out_ref   : (B, tc)     f32
    """
    eps = 1e-12
    j = pl.program_id(0)

    x = x_ref[...].astype(jnp.float32)                                   # (B, D)
    # inverse row norm of x (tiny; recomputed per tile is cheaper than sync)
    inv_x = 1.0 / jnp.maximum(
        jnp.sqrt(jnp.sum(x * x, axis=-1, keepdims=True)), eps)           # (B, 1)
    x_mm = x.astype(compute_dtype)

    # ---- max over K sub-centers of cos(x, w_k) ----
    cosine = None
    for k in range(K):                       # static unroll, K is small (e.g. 3)
        wk = w_ref[:, pl.ds(k * D, D)].astype(jnp.float32)               # (tc, D)
        # inverse row norms of this sub-center's weights (post-scale instead of
        # normalizing the weight tile elementwise)
        inv_wk = 1.0 / jnp.maximum(
            jnp.sqrt(jnp.sum(wk * wk, axis=-1)), eps)                    # (tc,)
        dk = lax.dot_general(                                            # (B, tc)
            x_mm, wk.astype(compute_dtype),
            dimension_numbers=(((1,), (1,)), ((), ())),
            preferred_element_type=jnp.float32)
        ck = dk * inv_wk[None, :]
        cosine = ck if cosine is None else jnp.maximum(cosine, ck)
    # inv_x > 0, so scaling commutes with the max-over-K
    cosine = cosine * inv_x                                              # (B, tc)

    # ---- arc-margin elementwise math ----
    sine = jnp.sqrt(jnp.clip(1.0 - cosine * cosine, 0.0, 1.0))
    phi = cosine * cos_m - sine * sin_m
    if easy_margin:
        phi = jnp.where(cosine > 0.0, phi, cosine)
    else:
        phi = jnp.where(cosine > th, phi, cosine - mm)

    # ---- one-hot(label) within this class tile (offset by the tile base) ----
    label = label_ref[...].astype(jnp.int32)                             # (B, 1)
    col = lax.broadcasted_iota(jnp.int32, cosine.shape, 1) + j * tc
    one_hot = (col == label).astype(jnp.float32)
    if ls_eps > 0.0:
        one_hot = (1.0 - ls_eps) * one_hot + ls_eps / out_features

    out_ref[...] = ((one_hot * phi + (1.0 - one_hot) * cosine) * s).astype(
        out_ref.dtype)


def subcenter_arcface(x, weight, label, *, out_features, K=3, s=30.0, m=0.5,
                      easy_margin=False, ls_eps=0.0, class_tile=512,
                      compute_dtype=jnp.float32):
    """x: (B, in_features) f32; weight: (out_features*K, in_features) f32
    (PyTorch row r = class*K + k); label: (B,) int.  Returns (B, out_features).

    class_tile: classes per grid step (rounded to a multiple of 128).
                512 is a good default everywhere; raise to 1024-2048 on
                v5e/v6e (128 MiB VMEM) if D is small, keep <=512 on v7x.
    compute_dtype: dtype fed to the MXU (jnp.bfloat16 halves weight-side HBM
                bytes if the accuracy budget allows; f32 here to match ref).
    """
    B, D = x.shape
    C = out_features
    assert weight.shape == (C * K, D), "weight must be (out_features*K, in_features)"

    # Free view: (C*K, D) -> (C, K*D).  Row c = the K sub-center vectors of
    # class c concatenated along the feature axis.  No transpose, no HBM copy.
    w2d = weight.reshape(C, K * D)

    # Lane-dense class tile (multiple of 128); pad C only when ragged.
    class_tile = max(128, _round_up(class_tile, 128))
    tc = min(class_tile, _round_up(C, 128))
    C_pad = _round_up(C, tc)
    if C_pad != C:
        # Zero rows -> zero dots -> cosine 0 for padded classes; sliced off below.
        w2d = jnp.pad(w2d, ((0, C_pad - C), (0, 0)))

    label_2d = label.reshape(B, 1).astype(jnp.int32)

    kernel = functools.partial(
        _subcenter_arcface_kernel,
        K=K, D=D, tc=tc, s=float(s),
        cos_m=math.cos(m), sin_m=math.sin(m),
        th=math.cos(math.pi - m), mm=math.sin(math.pi - m) * m,
        easy_margin=easy_margin, ls_eps=float(ls_eps), out_features=C,
        compute_dtype=compute_dtype,
    )

    grid = (C_pad // tc,)
    cost = pl.CostEstimate(
        flops=2 * B * C_pad * K * D,
        transcendentals=0,
        bytes_accessed=4 * (B * D + C_pad * K * D + B * C_pad + B),
    )

    out = pl.pallas_call(
        kernel,
        out_shape=jax.ShapeDtypeStruct((B, C_pad), jnp.float32),
        grid=grid,
        in_specs=[
            pl.BlockSpec((B, D), lambda j: (0, 0)),         # x: resident
            pl.BlockSpec((tc, K * D), lambda j: (j, 0)),    # weight tile stream
            pl.BlockSpec((B, 1), lambda j: (0, 0)),         # labels: resident
        ],
        out_specs=pl.BlockSpec((B, tc), lambda j: (0, j)),
        compiler_params=pltpu.CompilerParams(
            dimension_semantics=("parallel",)),             # megacore splits C
        cost_estimate=cost,
    )(x, w2d, label_2d)

    return out[:, :C] if C_pad != C else out


def _reference(x, weight, label, *, out_features, K, s, m, easy_margin, ls_eps):
    # pure-JAX reference mirroring the PyTorch forward
    eps = 1e-12
    xn = x / jnp.maximum(jnp.linalg.norm(x, axis=1, keepdims=True), eps)
    wn = weight / jnp.maximum(jnp.linalg.norm(weight, axis=1, keepdims=True), eps)
    cosine = xn @ wn.T                                       # (B, C*K)
    cosine = cosine.reshape(-1, out_features, K).max(axis=2)
    sine = jnp.sqrt(jnp.clip(1.0 - cosine ** 2, 0.0, 1.0))
    phi = cosine * math.cos(m) - sine * math.sin(m)
    if easy_margin:
        phi = jnp.where(cosine > 0, phi, cosine)
    else:
        phi = jnp.where(cosine > math.cos(math.pi - m), phi,
                        cosine - math.sin(math.pi - m) * m)
    one_hot = jax.nn.one_hot(label, out_features, dtype=cosine.dtype)
    if ls_eps > 0:
        one_hot = (1 - ls_eps) * one_hot + ls_eps / out_features
    return (one_hot * phi + (1.0 - one_hot) * cosine) * s


if __name__ == "__main__":
    B, in_features, out_features, K = 8, 32, 16, 3
    s_, m_, easy_margin, ls_eps = 30.0, 0.5, False, 0.0

    key = jax.random.PRNGKey(0)
    kx, kw, kl = jax.random.split(key, 3)

    x = jax.random.normal(kx, (B, in_features), dtype=jnp.float32)

    # xavier_uniform_ on weight of shape (out_features*K, in_features)
    fan_out, fan_in = out_features * K, in_features
    limit = math.sqrt(6.0 / (fan_in + fan_out))
    weight = jax.random.uniform(kw, (fan_out, fan_in), dtype=jnp.float32,
                                minval=-limit, maxval=limit)

    label = jax.random.randint(kl, (B,), 0, out_features, dtype=jnp.int32)

    out = subcenter_arcface(x, weight, label, out_features=out_features,
                            K=K, s=s_, m=m_, easy_margin=easy_margin,
                            ls_eps=ls_eps)
    out = jax.block_until_ready(out)

    ref = _reference(x, weight, label, out_features=out_features, K=K, s=s_,
                     m=m_, easy_margin=easy_margin, ls_eps=ls_eps)
    assert out.shape == (B, out_features)
    assert jnp.allclose(out, ref, atol=1e-4, rtol=1e-4), "mismatch vs reference"

    print("KERNEL_OK")
</pallas_src>

<mosaic_0001>
module attributes {stable_mosaic.version = 11 : i64} {
  func.func @_subcenter_arcface_kernel(%arg0: i32, %arg1: memref<8x32xf32, #tpu.memory_space<vmem>>, %arg2: memref<128x96xf32, #tpu.memory_space<vmem>>, %arg3: memref<8x1xi32, #tpu.memory_space<vmem>>, %arg4: memref<8x128xf32, #tpu.memory_space<vmem>>) attributes {dimension_semantics = [#tpu.dimension_semantics<parallel>], iteration_bounds = array<i64: 1>, scalar_prefetch = 0 : i64, scratch_operands = 0 : i64, tpu.core_type = #tpu.core_type<tc>, window_params = [{pipeline_mode = #tpu.pipeline_mode<synchronous>, transform_indices = @transform_0, window_bounds = array<i64: 8, 32>}, {transform_indices = @transform_1, window_bounds = array<i64: 128, 96>}, {pipeline_mode = #tpu.pipeline_mode<synchronous>, transform_indices = @transform_2, window_bounds = array<i64: 8, 1>}, {transform_indices = @transform_3, window_bounds = array<i64: 8, 128>}]} {
    %c0 = arith.constant 0 : index
    %c0_0 = arith.constant 0 : index
    %0 = vector.load %arg1[%c0, %c0_0] : memref<8x32xf32, #tpu.memory_space<vmem>>, vector<8x32xf32>
    %1 = arith.mulf %0, %0 : vector<8x32xf32>
    %cst = arith.constant dense<0.000000e+00> : vector<8xf32>
    %2 = vector.multi_reduction <add>, %1, %cst [1] : vector<8x32xf32> to vector<8xf32>
    %3 = vector.shape_cast %2 : vector<8xf32> to vector<8x1xf32>
    %4 = math.sqrt %3 : vector<8x1xf32>
    %cst_1 = arith.constant 9.99999996E-13 : f32
    %5 = vector.broadcast %cst_1 : f32 to vector<8x1xf32>
    %6 = arith.maximumf %4, %5 : vector<8x1xf32>
    %cst_2 = arith.constant 1.000000e+00 : f32
    %7 = vector.broadcast %cst_2 : f32 to vector<8x1xf32>
    %8 = arith.divf %7, %6 : vector<8x1xf32>
    %c0_3 = arith.constant 0 : index
    %c0_4 = arith.constant 0 : index
    %9 = vector.load %arg2[%c0_3, %c0_4] : memref<128x96xf32, #tpu.memory_space<vmem>>, vector<128x32xf32>
    %10 = arith.mulf %9, %9 : vector<128x32xf32>
    %cst_5 = arith.constant dense<0.000000e+00> : vector<128xf32>
    %11 = vector.multi_reduction <add>, %10, %cst_5 [1] : vector<128x32xf32> to vector<128xf32>
    %12 = math.sqrt %11 : vector<128xf32>
    %cst_6 = arith.constant 9.99999996E-13 : f32
    %13 = vector.broadcast %cst_6 : f32 to vector<128xf32>
    %14 = arith.maximumf %12, %13 : vector<128xf32>
    %cst_7 = arith.constant 1.000000e+00 : f32
    %15 = vector.broadcast %cst_7 : f32 to vector<128xf32>
    %16 = arith.divf %15, %14 : vector<128xf32>
    %cst_8 = arith.constant dense<0.000000e+00> : vector<8x128xf32>
    %17 = tpu.matmul %0, %9, %cst_8 {dimension_numbers = #tpu.dot_dimension_numbers<[1], [1], [0], [0], [0, 0, 1, 0], [], []>} : vector<8x32xf32>, vector<128x32xf32>, vector<8x128xf32> -> vector<8x128xf32>
    %18 = vector.shape_cast %16 : vector<128xf32> to vector<1x128xf32>
    %19 = vector.broadcast %18 : vector<1x128xf32> to vector<8x128xf32>
    %20 = arith.mulf %17, %19 : vector<8x128xf32>
    %c0_9 = arith.constant 0 : index
    %c32 = arith.constant 32 : index
    %21 = vector.load %arg2[%c0_9, %c32] : memref<128x96xf32, #tpu.memory_space<vmem>>, vector<128x32xf32>
    %22 = arith.mulf %21, %21 : vector<128x32xf32>
    %cst_10 = arith.constant dense<0.000000e+00> : vector<128xf32>
    %23 = vector.multi_reduction <add>, %22, %cst_10 [1] : vector<128x32xf32> to vector<128xf32>
    %24 = math.sqrt %23 : vector<128xf32>
    %cst_11 = arith.constant 9.99999996E-13 : f32
    %25 = vector.broadcast %cst_11 : f32 to vector<128xf32>
    %26 = arith.maximumf %24, %25 : vector<128xf32>
    %cst_12 = arith.constant 1.000000e+00 : f32
    %27 = vector.broadcast %cst_12 : f32 to vector<128xf32>
    %28 = arith.divf %27, %26 : vector<128xf32>
    %cst_13 = arith.constant dense<0.000000e+00> : vector<8x128xf32>
    %29 = tpu.matmul %0, %21, %cst_13 {dimension_numbers = #tpu.dot_dimension_numbers<[1], [1], [0], [0], [0, 0, 1, 0], [], []>} : vector<8x32xf32>, vector<128x32xf32>, vector<8x128xf32> -> vector<8x128xf32>
    %30 = vector.shape_cast %28 : vector<128xf32> to vector<1x128xf32>
    %31 = vector.broadcast %30 : vector<1x128xf32> to vector<8x128xf32>
    %32 = arith.mulf %29, %31 : vector<8x128xf32>
    %33 = arith.maximumf %20, %32 : vector<8x128xf32>
    %c0_14 = arith.constant 0 : index
    %c64 = arith.constant 64 : index
    %34 = vector.load %arg2[%c0_14, %c64] : memref<128x96xf32, #tpu.memory_space<vmem>>, vector<128x32xf32>
    %35 = arith.mulf %34, %34 : vector<128x32xf32>
    %cst_15 = arith.constant dense<0.000000e+00> : vector<128xf32>
    %36 = vector.multi_reduction <add>, %35, %cst_15 [1] : vector<128x32xf32> to vector<128xf32>
    %37 = math.sqrt %36 : vector<128xf32>
    %cst_16 = arith.constant 9.99999996E-13 : f32
    %38 = vector.broadcast %cst_16 : f32 to vector<128xf32>
    %39 = arith.maximumf %37, %38 : vector<128xf32>
    %cst_17 = arith.constant 1.000000e+00 : f32
    %40 = vector.broadcast %cst_17 : f32 to vector<128xf32>
    %41 = arith.divf %40, %39 : vector<128xf32>
    %cst_18 = arith.constant dense<0.000000e+00> : vector<8x128xf32>
    %42 = tpu.matmul %0, %34, %cst_18 {dimension_numbers = #tpu.dot_dimension_numbers<[1], [1], [0], [0], [0, 0, 1, 0], [], []>} : vector<8x32xf32>, vector<128x32xf32>, vector<8x128xf32> -> vector<8x128xf32>
    %43 = vector.shape_cast %41 : vector<128xf32> to vector<1x128xf32>
    %44 = vector.broadcast %43 : vector<1x128xf32> to vector<8x128xf32>
    %45 = arith.mulf %42, %44 : vector<8x128xf32>
    %46 = arith.maximumf %33, %45 : vector<8x128xf32>
    %47 = vector.broadcast %8 : vector<8x1xf32> to vector<8x128xf32>
    %48 = arith.mulf %46, %47 : vector<8x128xf32>
    %49 = arith.mulf %48, %48 : vector<8x128xf32>
    %cst_19 = arith.constant 1.000000e+00 : f32
    %50 = vector.broadcast %cst_19 : f32 to vector<8x128xf32>
    %51 = arith.subf %50, %49 : vector<8x128xf32>
    %cst_20 = arith.constant 0.000000e+00 : f32
    %cst_21 = arith.constant 1.000000e+00 : f32
    %52 = vector.broadcast %cst_20 : f32 to vector<8x128xf32>
    %53 = arith.maximumf %52, %51 : vector<8x128xf32>
    %54 = vector.broadcast %cst_21 : f32 to vector<8x128xf32>
    %55 = arith.minimumf %54, %53 : vector<8x128xf32>
    %56 = math.sqrt %55 : vector<8x128xf32>
    %cst_22 = arith.constant 0.87758255 : f32
    %57 = vector.broadcast %cst_22 : f32 to vector<8x128xf32>
    %58 = arith.mulf %48, %57 : vector<8x128xf32>
    %cst_23 = arith.constant 0.47942555 : f32
    %59 = vector.broadcast %cst_23 : f32 to vector<8x128xf32>
    %60 = arith.mulf %56, %59 : vector<8x128xf32>
    %61 = arith.subf %58, %60 : vector<8x128xf32>
    %cst_24 = arith.constant -0.87758255 : f32
    %62 = vector.broadcast %cst_24 : f32 to vector<8x128xf32>
    %63 = arith.cmpf ogt, %48, %62 : vector<8x128xf32>
    %cst_25 = arith.constant 0.239712775 : f32
    %64 = vector.broadcast %cst_25 : f32 to vector<8x128xf32>
    %65 = arith.subf %48, %64 : vector<8x128xf32>
    %66 = arith.select %63, %61, %65 : vector<8x128xi1>, vector<8x128xf32>
    %c0_26 = arith.constant 0 : index
    %c0_27 = arith.constant 0 : index
    %67 = vector.load %arg3[%c0_26, %c0_27] : memref<8x1xi32, #tpu.memory_space<vmem>>, vector<8x1xi32>
    %68 = tpu.iota {dimensions = array<i32: 1>} : vector<8x128xi32>
    %c128_i32 = arith.constant 128 : i32
    %69 = arith.muli %arg0, %c128_i32 : i32
    %70 = vector.broadcast %69 : i32 to vector<8x128xi32>
    %71 = arith.addi %68, %70 : vector<8x128xi32>
    %72 = vector.broadcast %67 : vector<8x1xi32> to vector<8x128xi32>
    %73 = arith.cmpi eq, %71, %72 : vector<8x128xi32>
    %74 = arith.extui %73 : vector<8x128xi1> to vector<8x128xi32>
    %75 = arith.sitofp %74 : vector<8x128xi32> to vector<8x128xf32>
    %76 = arith.mulf %75, %66 : vector<8x128xf32>
    %cst_28 = arith.constant 1.000000e+00 : f32
    %77 = vector.broadcast %cst_28 : f32 to vector<8x128xf32>
    %78 = arith.subf %77, %75 : vector<8x128xf32>
    %79 = arith.mulf %78, %48 : vector<8x128xf32>
    %80 = arith.addf %76, %79 : vector<8x128xf32>
    %cst_29 = arith.constant 3.000000e+01 : f32
    %81 = vector.broadcast %cst_29 : f32 to vector<8x128xf32>
    %82 = arith.mulf %80, %81 : vector<8x128xf32>
    %c0_30 = arith.constant 0 : index
    %c0_31 = arith.constant 0 : index
    %83 = vector.load %arg4[%c0_30, %c0_31] : memref<8x128xf32, #tpu.memory_space<vmem>>, vector<8x128xf32>
    tpu.vector_store %arg4[%c0_30, %c0_31], %82 {strides = array<i32>} : memref<8x128xf32, #tpu.memory_space<vmem>>, vector<8x128xf32>,
    return
  }
  func.func @transform_0(%arg0: i32) -> (i32, i32) {
    %c0_i32 = arith.constant 0 : i32
    %c0_i32_0 = arith.constant 0 : i32
    %c0_i32_1 = arith.constant 0 : i32
    return %c0_i32, %c0_i32_0 : i32, i32
  }
  func.func @transform_1(%arg0: i32) -> (i32, i32) {
    %c0_i32 = arith.constant 0 : i32
    %c0_i32_0 = arith.constant 0 : i32
    return %arg0, %c0_i32 : i32, i32
  }
  func.func @transform_2(%arg0: i32) -> (i32, i32) {
    %c0_i32 = arith.constant 0 : i32
    %c0_i32_0 = arith.constant 0 : i32
    %c0_i32_1 = arith.constant 0 : i32
    return %c0_i32, %c0_i32_0 : i32, i32
  }
  func.func @transform_3(%arg0: i32) -> (i32, i32) {
    %c0_i32 = arith.constant 0 : i32
    %c0_i32_0 = arith.constant 0 : i32
    return %c0_i32, %arg0 : i32, i32
  }
}

</mosaic_0001>

<llo_original>
// kernel: tpu_custom_call.1
$region0: #{tpu_custom_call.1}
  #allocation0 [shape = 'u32[]', space=smem, size = 0x4, offset = 0x4, fixed_abs, tag = 'smem constant byte address 0x4 - core index']
  #allocation1 [shape = 'u32[144,128]{1,0:T(1,128)}', space=vmem, size = 0x12000, scoped, tag = 'internal scratch']
  %s0 = inlined_call_operand.vmem [shape: f32[8,32], index: 0, kind: input, shape index: {}]
  %s1 = inlined_call_operand.vmem [shape: f32[128,96], index: 1, kind: input, shape index: {}]
  %s2 = inlined_call_operand.vmem [shape: s32[8,1], index: 2, kind: input, shape index: {}]
  %s3 = inlined_call_operand.hbm [shape: f32[8,128], index: 3, kind: output, shape index: {}]
  %s4 = sld [smem:[#allocation0]]
  $region22: #{tpu_custom_call.1} parent=0
    _
  %s6 = ssub.s32 1, %s4
  %s7 = scalar_select 0, %s6, %s4
  $region1: #{tpu_custom_call.1} parent=0
    #allocation2 [shape = 'u8[4096]{0}', space=vmem, size = 0x1000, scoped, tag = 'output window, operand 0, single buffered']
    #allocation3 [shape = 's32[1]{0}', space=sflag, size = 0x4, scoped, tag = 'scoped memory for tpu_custom_call.1']
    %8 = vsyncpa [#allocation3], 0
    // Predicated region
    $region2: #{tpu_custom_call.1} parent=1 // pred_check
      _
    $region3: #{tpu_custom_call.1} parent=1 // pred_check_branch
      %10 = sbr.rel (0) target = $region5
    $region4: #{tpu_custom_call.1} parent=1 // pred_region
      _
    $region5: #{tpu_custom_call.1} parent=1 // pred_fallthru
      _
    // Predicated region
    $region6: #{tpu_custom_call.1} parent=1 // pred_check
      _
    $region7: #{tpu_custom_call.1} parent=1 // pred_check_branch
      %12 = sbr.rel (0) target = $region9
    $region8: #{tpu_custom_call.1} parent=1 // pred_region
      _
    $region9: #{tpu_custom_call.1} parent=1 // pred_fallthru
      _
    // Predicated region
    $region10: #{tpu_custom_call.1} parent=1 // pred_check
      _
    $region11: #{tpu_custom_call.1} parent=1 // pred_check_branch
      %14 = sbr.rel (0) target = $region13
    $region12: #{tpu_custom_call.1} parent=1 // pred_region
      _
    $region13: #{tpu_custom_call.1} parent=1 // pred_fallthru
      _
    %v15 = vld [vmem:[%s0] sm:$0xff]
    %v16 = vmul.f32 %v15, %v15
    %vm17 = vcmask 261120
    %v18 = vsel %vm17, %v16, 0.0
    %19 = vadd.xlane.f32.xlu0 %v18
    %v20 = vpop.xlane.xlu0 %19
    %v21 = vrsqrt.pop %v20
    %v22 = vmul.f32 %v20, %v21
    %vm23 = vcmp.eq.f32.partialorder %v20, inf
    %v24 = vsel %vm23, %v20, %v22
    %vm25 = vcmp.eq.f32.partialorder %v20, 0.0
    %v26 = vand.u32 %v20, 2147483648
    %v27 = vsel %vm25, %v26, %v24
    %v28 = vmax.f32 %v27, 1e-12
    %v29 = vrcp.pop %v28
    %v30 = vmul.f32 1.0, %v29
    %v31 = vld [vmem:[%s1] sm:$0xff]
    %v32 = vld [vmem:[%s1 + $0x8] sm:$0xff]
    %v33 = vld [vmem:[%s1 + $0x10] sm:$0xff]
    %v34 = vld [vmem:[%s1 + $0x18] sm:$0xff]
    %v35 = vld [vmem:[%s1 + $0x20] sm:$0xff]
    %v36 = vld [vmem:[%s1 + $0x28] sm:$0xff]
    %v37 = vld [vmem:[%s1 + $0x30] sm:$0xff]
    %v38 = vld [vmem:[%s1 + $0x38] sm:$0xff]
    %v39 = vld [vmem:[%s1 + $0x40] sm:$0xff]
    %v40 = vld [vmem:[%s1 + $0x48] sm:$0xff]
    %v41 = vld [vmem:[%s1 + $0x50] sm:$0xff]
    %v42 = vld [vmem:[%s1 + $0x58] sm:$0xff]
    %v43 = vld [vmem:[%s1 + $0x60] sm:$0xff]
    %v44 = vld [vmem:[%s1 + $0x68] sm:$0xff]
    %v45 = vld [vmem:[%s1 + $0x70] sm:$0xff]
    %v46 = vld [vmem:[%s1 + $0x78] sm:$0xff]
    %v47 = vmul.f32 %v31, %v31
    %v48 = vmul.f32 %v32, %v32
    %v49 = vmul.f32 %v33, %v33
    %v50 = vmul.f32 %v34, %v34
    %v51 = vmul.f32 %v35, %v35
    %v52 = vmul.f32 %v36, %v36
    %v53 = vmul.f32 %v37, %v37
    %v54 = vmul.f32 %v38, %v38
    %v55 = vmul.f32 %v39, %v39
    %v56 = vmul.f32 %v40, %v40
    %v57 = vmul.f32 %v41, %v41
    %v58 = vmul.f32 %v42, %v42
    %v59 = vmul.f32 %v43, %v43
    %v60 = vmul.f32 %v44, %v44
    %v61 = vmul.f32 %v45, %v45
    %v62 = vmul.f32 %v46, %v46
    %v63 = vsel %vm17, %v47, 0.0
    %64 = vadd.xlane.f32.xlu0 %v63
    %v65 = vpop.xlane.xlu0 %64
    %v66 = vsel %vm17, %v48, 0.0
    %67 = vadd.xlane.f32.xlu0 %v66
    %v68 = vpop.xlane.xlu0 %67
    %v69 = vsel %vm17, %v49, 0.0
    %70 = vadd.xlane.f32.xlu0 %v69
    %v71 = vpop.xlane.xlu0 %70
    %v72 = vsel %vm17, %v50, 0.0
    %73 = vadd.xlane.f32.xlu0 %v72
    %v74 = vpop.xlane.xlu0 %73
    %v75 = vsel %vm17, %v51, 0.0
    %76 = vadd.xlane.f32.xlu0 %v75
    %v77 = vpop.xlane.xlu0 %76
    %v78 = vsel %vm17, %v52, 0.0
    %79 = vadd.xlane.f32.xlu0 %v78
    %v80 = vpop.xlane.xlu0 %79
    %v81 = vsel %vm17, %v53, 0.0
    %82 = vadd.xlane.f32.xlu0 %v81
    %v83 = vpop.xlane.xlu0 %82
    %v84 = vsel %vm17, %v54, 0.0
    %85 = vadd.xlane.f32.xlu0 %v84
    %v86 = vpop.xlane.xlu0 %85
    %v87 = vsel %vm17, %v55, 0.0
    %88 = vadd.xlane.f32.xlu0 %v87
    %v89 = vpop.xlane.xlu0 %88
    %v90 = vsel %vm17, %v56, 0.0
    %91 = vadd.xlane.f32.xlu0 %v90
    %v92 = vpop.xlane.xlu0 %91
    %v93 = vsel %vm17, %v57, 0.0
    %94 = vadd.xlane.f32.xlu0 %v93
    %v95 = vpop.xlane.xlu0 %94
    %v96 = vsel %vm17, %v58, 0.0
    %97 = vadd.xlane.f32.xlu0 %v96
    %v98 = vpop.xlane.xlu0 %97
    %v99 = vsel %vm17, %v59, 0.0
    %100 = vadd.xlane.f32.xlu0 %v99
    %v101 = vpop.xlane.xlu0 %100
    %v102 = vsel %vm17, %v60, 0.0
    %103 = vadd.xlane.f32.xlu0 %v102
    %v104 = vpop.xlane.xlu0 %103
    %v105 = vsel %vm17, %v61, 0.0
    %106 = vadd.xlane.f32.xlu0 %v105
    %v107 = vpop.xlane.xlu0 %106
    %v108 = vsel %vm17, %v62, 0.0
    %109 = vadd.xlane.f32.xlu0 %v108
    %v110 = vpop.xlane.xlu0 %109
    %v111 = vrsqrt.pop %v65
    %v112 = vmul.f32 %v65, %v111
    %vm113 = vcmp.eq.f32.partialorder %v65, inf
    %v114 = vsel %vm113, %v65, %v112
    %vm115 = vcmp.eq.f32.partialorder %v65, 0.0
    %v116 = vand.u32 %v65, 2147483648
    %v117 = vsel %vm115, %v116, %v114
    %v118 = vrsqrt.pop %v68
    %v119 = vmul.f32 %v68, %v118
    %vm120 = vcmp.eq.f32.partialorder %v68, inf
    %v121 = vsel %vm120, %v68, %v119
    %vm122 = vcmp.eq.f32.partialorder %v68, 0.0
    %v123 = vand.u32 %v68, 2147483648
    %v124 = vsel %vm122, %v123, %v121
    %v125 = vrsqrt.pop %v71
    %v126 = vmul.f32 %v71, %v125
    %vm127 = vcmp.eq.f32.partialorder %v71, inf
    %v128 = vsel %vm127, %v71, %v126
    %vm129 = vcmp.eq.f32.partialorder %v71, 0.0
    %v130 = vand.u32 %v71, 2147483648
    %v131 = vsel %vm129, %v130, %v128
    %v132 = vrsqrt.pop %v74
    %v133 = vmul.f32 %v74, %v132
    %vm134 = vcmp.eq.f32.partialorder %v74, inf
    %v135 = vsel %vm134, %v74, %v133
    %vm136 = vcmp.eq.f32.partialorder %v74, 0.0
    %v137 = vand.u32 %v74, 2147483648
    %v138 = vsel %vm136, %v137, %v135
    %v139 = vrsqrt.pop %v77
    %v140 = vmul.f32 %v77, %v139
    %vm141 = vcmp.eq.f32.partialorder %v77, inf
    %v142 = vsel %vm141, %v77, %v140
    %vm143 = vcmp.eq.f32.partialorder %v77, 0.0
    %v144 = vand.u32 %v77, 2147483648
    %v145 = vsel %vm143, %v144, %v142
    %v146 = vrsqrt.pop %v80
    %v147 = vmul.f32 %v80, %v146
    %vm148 = vcmp.eq.f32.partialorder %v80, inf
    %v149 = vsel %vm148, %v80, %v147
    %vm150 = vcmp.eq.f32.partialorder %v80, 0.0
    %v151 = vand.u32 %v80, 2147483648
    %v152 = vsel %vm150, %v151, %v149
    %v153 = vrsqrt.pop %v83
    %v154 = vmul.f32 %v83, %v153
    %vm155 = vcmp.eq.f32.partialorder %v83, inf
    %v156 = vsel %vm155, %v83, %v154
    %vm157 = vcmp.eq.f32.partialorder %v83, 0.0
    %v158 = vand.u32 %v83, 2147483648
    %v159 = vsel %vm157, %v158, %v156
    %v160 = vrsqrt.pop %v86
    %v161 = vmul.f32 %v86, %v160
    %vm162 = vcmp.eq.f32.partialorder %v86, inf
    %v163 = vsel %vm162, %v86, %v161
    %vm164 = vcmp.eq.f32.partialorder %v86, 0.0
    %v165 = vand.u32 %v86, 2147483648
    %v166 = vsel %vm164, %v165, %v163
    %v167 = vrsqrt.pop %v89
    %v168 = vmul.f32 %v89, %v167
    %vm169 = vcmp.eq.f32.partialorder %v89, inf
    %v170 = vsel %vm169, %v89, %v168
    %vm171 = vcmp.eq.f32.partialorder %v89, 0.0
    %v172 = vand.u32 %v89, 2147483648
    %v173 = vsel %vm171, %v172, %v170
    %v174 = vrsqrt.pop %v92
    %v175 = vmul.f32 %v92, %v174
    %vm176 = vcmp.eq.f32.partialorder %v92, inf
    %v177 = vsel %vm176, %v92, %v175
    %vm178 = vcmp.eq.f32.partialorder %v92, 0.0
    %v179 = vand.u32 %v92, 2147483648
    %v180 = vsel %vm178, %v179, %v177
    %v181 = vrsqrt.pop %v95
    %v182 = vmul.f32 %v95, %v181
    %vm183 = vcmp.eq.f32.partialorder %v95, inf
    %v184 = vsel %vm183, %v95, %v182
    %vm185 = vcmp.eq.f32.partialorder %v95, 0.0
    %v186 = vand.u32 %v95, 2147483648
    %v187 = vsel %vm185, %v186, %v184
    %v188 = vrsqrt.pop %v98
    %v189 = vmul.f32 %v98, %v188
    %vm190 = vcmp.eq.f32.partialorder %v98, inf
    %v191 = vsel %vm190, %v98, %v189
    %vm192 = vcmp.eq.f32.partialorder %v98, 0.0
    %v193 = vand.u32 %v98, 2147483648
    %v194 = vsel %vm192, %v193, %v191
    %v195 = vrsqrt.pop %v101
    %v196 = vmul.f32 %v101, %v195
    %vm197 = vcmp.eq.f32.partialorder %v101, inf
    %v198 = vsel %vm197, %v101, %v196
    %vm199 = vcmp.eq.f32.partialorder %v101, 0.0
    %v200 = vand.u32 %v101, 2147483648
    %v201 = vsel %vm199, %v200, %v198
    %v202 = vrsqrt.pop %v104
    %v203 = vmul.f32 %v104, %v202
    %vm204 = vcmp.eq.f32.partialorder %v104, inf
    %v205 = vsel %vm204, %v104, %v203
    %vm206 = vcmp.eq.f32.partialorder %v104, 0.0
    %v207 = vand.u32 %v104, 2147483648
    %v208 = vsel %vm206, %v207, %v205
    %v209 = vrsqrt.pop %v107
    %v210 = vmul.f32 %v107, %v209
    %vm211 = vcmp.eq.f32.partialorder %v107, inf
    %v212 = vsel %vm211, %v107, %v210
    %vm213 = vcmp.eq.f32.partialorder %v107, 0.0
    %v214 = vand.u32 %v107, 2147483648
    %v215 = vsel %vm213, %v214, %v212
    %v216 = vrsqrt.pop %v110
    %v217 = vmul.f32 %v110, %v216
    %vm218 = vcmp.eq.f32.partialorder %v110, inf
    %v219 = vsel %vm218, %v110, %v217
    %vm220 = vcmp.eq.f32.partialorder %v110, 0.0
    %v221 = vand.u32 %v110, 2147483648
    %v222 = vsel %vm220, %v221, %v219
    %v223 = vmax.f32 %v117, 1e-12
    %v224 = vmax.f32 %v124, 1e-12
    %v225 = vmax.f32 %v131, 1e-12
    %v226 = vmax.f32 %v138, 1e-12
    %v227 = vmax.f32 %v145, 1e-12
    %v228 = vmax.f32 %v152, 1e-12
    %v229 = vmax.f32 %v159, 1e-12
    %v230 = vmax.f32 %v166, 1e-12
    %v231 = vmax.f32 %v173, 1e-12
    %v232 = vmax.f32 %v180, 1e-12
    %v233 = vmax.f32 %v187, 1e-12
    %v234 = vmax.f32 %v194, 1e-12
    %v235 = vmax.f32 %v201, 1e-12
    %v236 = vmax.f32 %v208, 1e-12
    %v237 = vmax.f32 %v215, 1e-12
    %v238 = vmax.f32 %v222, 1e-12
    %v239 = vrcp.pop %v223
    %v240 = vmul.f32 1.0, %v239
    %v241 = vrcp.pop %v224
    %v242 = vmul.f32 1.0, %v241
    %v243 = vrcp.pop %v225
    %v244 = vmul.f32 1.0, %v243
    %v245 = vrcp.pop %v226
    %v246 = vmul.f32 1.0, %v245
    %v247 = vrcp.pop %v227
    %v248 = vmul.f32 1.0, %v247
    %v249 = vrcp.pop %v228
    %v250 = vmul.f32 1.0, %v249
    %v251 = vrcp.pop %v229
    %v252 = vmul.f32 1.0, %v251
    %v253 = vrcp.pop %v230
    %v254 = vmul.f32 1.0, %v253
    %v255 = vrcp.pop %v231
    %v256 = vmul.f32 1.0, %v255
    %v257 = vrcp.pop %v232
    %v258 = vmul.f32 1.0, %v257
    %v259 = vrcp.pop %v233
    %v260 = vmul.f32 1.0, %v259
    %v261 = vrcp.pop %v234
    %v262 = vmul.f32 1.0, %v261
    %v263 = vrcp.pop %v235
    %v264 = vmul.f32 1.0, %v263
    %v265 = vrcp.pop %v236
    %v266 = vmul.f32 1.0, %v265
    %v267 = vrcp.pop %v237
    %v268 = vmul.f32 1.0, %v267
    %v269 = vrcp.pop %v238
    %v270 = vmul.f32 1.0, %v269
    %v272 = vsel %vm17, %v15, 0
    %v275 = vsel %vm17, %v31, 0
    %v278 = vsel %vm17, %v32, 0
    %v281 = vsel %vm17, %v33, 0
    %v284 = vsel %vm17, %v34, 0
    %v287 = vsel %vm17, %v35, 0
    %v290 = vsel %vm17, %v36, 0
    %v293 = vsel %vm17, %v37, 0
    %v296 = vsel %vm17, %v38, 0
    %v299 = vsel %vm17, %v39, 0
    %v302 = vsel %vm17, %v40, 0
    %v305 = vsel %vm17, %v41, 0
    %v308 = vsel %vm17, %v42, 0
    %v311 = vsel %vm17, %v43, 0
    %v314 = vsel %vm17, %v44, 0
    %v317 = vsel %vm17, %v45, 0
    %v320 = vsel %vm17, %v46, 0
    %322 = vmatprep.subr.mxu0 0.0
    %323 = vmatpush1.xpose.msra.mxu0 %v275
    %324 = vmatprep.subr.mxu0 0.0
    %325 = vmatpush1.xpose.msra.mxu0 %v278
    %326 = vmatprep.subr.mxu0 0.0
    %327 = vmatpush1.xpose.msra.mxu0 %v281
    %328 = vmatprep.subr.mxu0 0.0
    %329 = vmatpush1.xpose.msra.mxu0 %v284
    %330 = vmatprep.subr.mxu0 0.0
    %331 = vmatpush1.xpose.msra.mxu0 %v287
    %332 = vmatprep.subr.mxu0 0.0
    %333 = vmatpush1.xpose.msra.mxu0 %v290
    %334 = vmatprep.subr.mxu0 0.0
    %335 = vmatpush1.xpose.msra.mxu0 %v293
    %336 = vmatprep.subr.mxu0 0.0
    %337 = vmatpush1.xpose.msra.mxu0 %v296
    %338 = vmatprep.subr.mxu0 0.0
    %339 = vmatpush1.xpose.msra.mxu0 %v299
    %340 = vmatprep.subr.mxu0 0.0
    %341 = vmatpush1.xpose.msra.mxu0 %v302
    %342 = vmatprep.subr.mxu0 0.0
    %343 = vmatpush1.xpose.msra.mxu0 %v305
    %344 = vmatprep.subr.mxu0 0.0
    %345 = vmatpush1.xpose.msra.mxu0 %v308
    %346 = vmatprep.subr.mxu0 0.0
    %347 = vmatpush1.xpose.msra.mxu0 %v311
    %348 = vmatprep.subr.mxu0 0.0
    %349 = vmatpush1.xpose.msra.mxu0 %v314
    %350 = vmatprep.subr.mxu0 0.0
    %351 = vmatpush1.xpose.msra.mxu0 %v317
    %352 = vmatprep.subr.mxu0 0.0
    %353 = vmatpush1.xpose.msra.mxu0 %v320
    %354 = vmatprep.subr.mxu0 0.0
    %355 = vmatpush1.xpose.msra.mxu0 0.0
    %356 = vmatprep.subr.mxu0 0.0
    %357 = vmatpush1.xpose.msra.mxu0 0.0
    %358 = vmatprep.subr.mxu0 0.0
    %359 = vmatpush1.xpose.msra.mxu0 0.0
    %360 = vmatprep.subr.mxu0 0.0
    %361 = vmatpush1.xpose.msra.mxu0 0.0
    %362 = vmatprep.subr.mxu0 0.0
    %363 = vmatpush1.xpose.msra.mxu0 0.0
    %364 = vmatprep.subr.mxu0 0.0
    %365 = vmatpush1.xpose.msra.mxu0 0.0
    %366 = vmatprep.subr.mxu0 0.0
    %367 = vmatpush1.xpose.msra.mxu0 0.0
    %368 = vmatprep.subr.mxu0 0.0
    %369 = vmatpush1.xpose.msra.mxu0 0.0
    %370 = vmatprep.subr.mxu0 0.0
    %371 = vmatpush1.xpose.msra.mxu0 0.0
    %372 = vmatprep.subr.mxu0 0.0
    %373 = vmatpush1.xpose.msra.mxu0 0.0
    %374 = vmatprep.subr.mxu0 0.0
    %375 = vmatpush1.xpose.msra.mxu0 0.0
    %376 = vmatprep.subr.mxu0 0.0
    %377 = vmatpush1.xpose.msra.mxu0 0.0
    %378 = vmatprep.subr.mxu0 0.0
    %379 = vmatpush1.xpose.msra.mxu0 0.0
    %380 = vmatprep.subr.mxu0 0.0
    %381 = vmatpush1.xpose.msra.mxu0 0.0
    %382 = vmatprep.subr.mxu0 0.0
    %383 = vmatpush1.xpose.msra.mxu0 0.0
    %384 = vmatprep.subr.mxu0 0.0
    %385 = vmatpush1.xpose.msra.mxu0 0.0
    %386 = vmatprep.mubr.f32.mxu0 0.0
    %387 = vmatmul.mubr.f32.gmra.mrb[0].mxu0 %v272
    %v388 = vpop.f32.mrb[0].mxu0
    %v389 = vadd.f32 0.0, %v388
    %v390 = vpop.f32.mrb[0].mxu0
    %391 = vdwg.mxu0
    %v408 = vlaneseq
    %v409 = vand.u32 %v408, 127
    %v410 = vlaneseq
    %v411 = vshrl.u32 %v410, 7
    %v412 = vsub.s32 %v409, %v411
    %v413 = vrot.slane %v240, %v412
    %v414 = vadd.s32 %v409, 4294967288
    %v415 = vlaneseq
    %v416 = vshrl.u32 %v415, 7
    %v417 = vsub.s32 %v414, %v416
    %v418 = vrot.slane %v242, %v417
    %vm419 = vcmask 130112
    %v420 = vsel %vm419, %v418, %v413
    %v421 = vadd.s32 %v409, 4294967280
    %v422 = vlaneseq
    %v423 = vshrl.u32 %v422, 7
    %v424 = vsub.s32 %v421, %v423
    %v425 = vrot.slane %v244, %v424
    %vm426 = vcmask 195712
    %v427 = vsel %vm426, %v425, %v420
    %v428 = vadd.s32 %v409, 4294967272
    %v429 = vlaneseq
    %v430 = vshrl.u32 %v429, 7
    %v431 = vsub.s32 %v428, %v430
    %v432 = vrot.slane %v246, %v431
    %vm433 = vcmask 261312
    %v434 = vsel %vm433, %v432, %v427
    %v435 = vadd.s32 %v409, 4294967264
    %v436 = vlaneseq
    %v437 = vshrl.u32 %v436, 7
    %v438 = vsub.s32 %v435, %v437
    %v439 = vrot.slane %v248, %v438
    %vm440 = vcmask 326912
    %v441 = vsel %vm440, %v439, %v434
    %v442 = vadd.s32 %v409, 4294967256
    %v443 = vlaneseq
    %v444 = vshrl.u32 %v443, 7
    %v445 = vsub.s32 %v442, %v444
    %v446 = vrot.slane %v250, %v445
    %vm447 = vcmask 392512
    %v448 = vsel %vm447, %v446, %v441
    %v449 = vadd.s32 %v409, 4294967248
    %v450 = vlaneseq
    %v451 = vshrl.u32 %v450, 7
    %v452 = vsub.s32 %v449, %v451
    %v453 = vrot.slane %v252, %v452
    %vm454 = vcmask 458112
    %v455 = vsel %vm454, %v453, %v448
    %v456 = vadd.s32 %v409, 4294967240
    %v457 = vlaneseq
    %v458 = vshrl.u32 %v457, 7
    %v459 = vsub.s32 %v456, %v458
    %v460 = vrot.slane %v254, %v459
    %vm461 = vcmask 523712
    %v462 = vsel %vm461, %v460, %v455
    %v463 = vadd.s32 %v409, 4294967232
    %v464 = vlaneseq
    %v465 = vshrl.u32 %v464, 7
    %v466 = vsub.s32 %v463, %v465
    %v467 = vrot.slane %v256, %v466
    %vm468 = vcmask 589312
    %v469 = vsel %vm468, %v467, %v462
    %v470 = vadd.s32 %v409, 4294967224
    %v471 = vlaneseq
    %v472 = vshrl.u32 %v471, 7
    %v473 = vsub.s32 %v470, %v472
    %v474 = vrot.slane %v258, %v473
    %vm475 = vcmask 654912
    %v476 = vsel %vm475, %v474, %v469
    %v477 = vadd.s32 %v409, 4294967216
    %v478 = vlaneseq
    %v479 = vshrl.u32 %v478, 7
    %v480 = vsub.s32 %v477, %v479
    %v481 = vrot.slane %v260, %v480
    %vm482 = vcmask 720512
    %v483 = vsel %vm482, %v481, %v476
    %v484 = vadd.s32 %v409, 4294967208
    %v485 = vlaneseq
    %v486 = vshrl.u32 %v485, 7
    %v487 = vsub.s32 %v484, %v486
    %v488 = vrot.slane %v262, %v487
    %vm489 = vcmask 786112
    %v490 = vsel %vm489, %v488, %v483
    %v491 = vadd.s32 %v409, 4294967200
    %v492 = vlaneseq
    %v493 = vshrl.u32 %v492, 7
    %v494 = vsub.s32 %v491, %v493
    %v495 = vrot.slane %v264, %v494
    %vm496 = vcmask 851712
    %v497 = vsel %vm496, %v495, %v490
    %v498 = vadd.s32 %v409, 4294967192
    %v499 = vlaneseq
    %v500 = vshrl.u32 %v499, 7
    %v501 = vsub.s32 %v498, %v500
    %v502 = vrot.slane %v266, %v501
    %vm503 = vcmask 917312
    %v504 = vsel %vm503, %v502, %v497
    %v505 = vadd.s32 %v409, 4294967184
    %v506 = vlaneseq
    %v507 = vshrl.u32 %v506, 7
    %v508 = vsub.s32 %v505, %v507
    %v509 = vrot.slane %v268, %v508
    %vm510 = vcmask 982912
    %v511 = vsel %vm510, %v509, %v504
    %v512 = vadd.s32 %v409, 4294967176
    %v513 = vlaneseq
    %v514 = vshrl.u32 %v513, 7
    %v515 = vsub.s32 %v512, %v514
    %v516 = vrot.slane %v270, %v515
    %vm517 = vcmask 1048512
    %v518 = vsel %vm517, %v516, %v511
    %vm519 = vcmask 1042434
    %v520 = vsel %vm519, %v518, %v518
    %vm521 = vcmask 1043459
    %v522 = vsel %vm521, %v518, %v520
    %vm523 = vcmask 1044484
    %v524 = vsel %vm523, %v518, %v522
    %vm525 = vcmask 1045509
    %v526 = vsel %vm525, %v518, %v524
    %vm527 = vcmask 1046534
    %v528 = vsel %vm527, %v518, %v526
    %vm529 = vcmask 1047559
    %v530 = vsel %vm529, %v518, %v528
    %v532 = vmul.f32 %v389, %v530
    %549 = vrot.lane.b32.xlu0 %v47, 96
    %v550 = vpop.permute.xlu0 %549
    %551 = vrot.lane.b32.xlu0 %v48, 96
    %v552 = vpop.permute.xlu0 %551
    %553 = vrot.lane.b32.xlu0 %v49, 96
    %v554 = vpop.permute.xlu0 %553
    %555 = vrot.lane.b32.xlu0 %v50, 96
    %v556 = vpop.permute.xlu0 %555
    %557 = vrot.lane.b32.xlu0 %v51, 96
    %v558 = vpop.permute.xlu0 %557
    %559 = vrot.lane.b32.xlu0 %v52, 96
    %v560 = vpop.permute.xlu0 %559
    %561 = vrot.lane.b32.xlu0 %v53, 96
    %v562 = vpop.permute.xlu0 %561
    %563 = vrot.lane.b32.xlu0 %v54, 96
    %v564 = vpop.permute.xlu0 %563
    %565 = vrot.lane.b32.xlu0 %v55, 96
    %v566 = vpop.permute.xlu0 %565
    %567 = vrot.lane.b32.xlu0 %v56, 96
    %v568 = vpop.permute.xlu0 %567
    %569 = vrot.lane.b32.xlu0 %v57, 96
    %v570 = vpop.permute.xlu0 %569
    %571 = vrot.lane.b32.xlu0 %v58, 96
    %v572 = vpop.permute.xlu0 %571
    %573 = vrot.lane.b32.xlu0 %v59, 96
    %v574 = vpop.permute.xlu0 %573
    %575 = vrot.lane.b32.xlu0 %v60, 96
    %v576 = vpop.permute.xlu0 %575
    %577 = vrot.lane.b32.xlu0 %v61, 96
    %v578 = vpop.permute.xlu0 %577
    %579 = vrot.lane.b32.xlu0 %v62, 96
    %v580 = vpop.permute.xlu0 %579
    %v597 = vsel %vm17, %v550, 0.0
    %598 = vadd.xlane.f32.xlu0 %v597
    %v599 = vpop.xlane.xlu0 %598
    %v600 = vsel %vm17, %v552, 0.0
    %601 = vadd.xlane.f32.xlu0 %v600
    %v602 = vpop.xlane.xlu0 %601
    %v603 = vsel %vm17, %v554, 0.0
    %604 = vadd.xlane.f32.xlu0 %v603
    %v605 = vpop.xlane.xlu0 %604
    %v606 = vsel %vm17, %v556, 0.0
    %607 = vadd.xlane.f32.xlu0 %v606
    %v608 = vpop.xlane.xlu0 %607
    %v609 = vsel %vm17, %v558, 0.0
    %610 = vadd.xlane.f32.xlu0 %v609
    %v611 = vpop.xlane.xlu0 %610
    %v612 = vsel %vm17, %v560, 0.0
    %613 = vadd.xlane.f32.xlu0 %v612
    %v614 = vpop.xlane.xlu0 %613
    %v615 = vsel %vm17, %v562, 0.0
    %616 = vadd.xlane.f32.xlu0 %v615
    %v617 = vpop.xlane.xlu0 %616
    %v618 = vsel %vm17, %v564, 0.0
    %619 = vadd.xlane.f32.xlu0 %v618
    %v620 = vpop.xlane.xlu0 %619
    %v621 = vsel %vm17, %v566, 0.0
    %622 = vadd.xlane.f32.xlu0 %v621
    %v623 = vpop.xlane.xlu0 %622
    %v624 = vsel %vm17, %v568, 0.0
    %625 = vadd.xlane.f32.xlu0 %v624
    %v626 = vpop.xlane.xlu0 %625
    %v627 = vsel %vm17, %v570, 0.0
    %628 = vadd.xlane.f32.xlu0 %v627
    %v629 = vpop.xlane.xlu0 %628
    %v630 = vsel %vm17, %v572, 0.0
    %631 = vadd.xlane.f32.xlu0 %v630
    %v632 = vpop.xlane.xlu0 %631
    %v633 = vsel %vm17, %v574, 0.0
    %634 = vadd.xlane.f32.xlu0 %v633
    %v635 = vpop.xlane.xlu0 %634
    %v636 = vsel %vm17, %v576, 0.0
    %637 = vadd.xlane.f32.xlu0 %v636
    %v638 = vpop.xlane.xlu0 %637
    %v639 = vsel %vm17, %v578, 0.0
    %640 = vadd.xlane.f32.xlu0 %v639
    %v641 = vpop.xlane.xlu0 %640
    %v642 = vsel %vm17, %v580, 0.0
    %643 = vadd.xlane.f32.xlu0 %v642
    %v644 = vpop.xlane.xlu0 %643
    %v645 = vrsqrt.pop %v599
    %v646 = vmul.f32 %v599, %v645
    %vm647 = vcmp.eq.f32.partialorder %v599, inf
    %v648 = vsel %vm647, %v599, %v646
    %vm649 = vcmp.eq.f32.partialorder %v599, 0.0
    %v650 = vand.u32 %v599, 2147483648
    %v651 = vsel %vm649, %v650, %v648
    %v652 = vrsqrt.pop %v602
    %v653 = vmul.f32 %v602, %v652
    %vm654 = vcmp.eq.f32.partialorder %v602, inf
    %v655 = vsel %vm654, %v602, %v653
    %vm656 = vcmp.eq.f32.partialorder %v602, 0.0
    %v657 = vand.u32 %v602, 2147483648
    %v658 = vsel %vm656, %v657, %v655
    %v659 = vrsqrt.pop %v605
    %v660 = vmul.f32 %v605, %v659
    %vm661 = vcmp.eq.f32.partialorder %v605, inf
    %v662 = vsel %vm661, %v605, %v660
    %vm663 = vcmp.eq.f32.partialorder %v605, 0.0
    %v664 = vand.u32 %v605, 2147483648
    %v665 = vsel %vm663, %v664, %v662
    %v666 = vrsqrt.pop %v608
    %v667 = vmul.f32 %v608, %v666
    %vm668 = vcmp.eq.f32.partialorder %v608, inf
    %v669 = vsel %vm668, %v608, %v667
    %vm670 = vcmp.eq.f32.partialorder %v608, 0.0
    %v671 = vand.u32 %v608, 2147483648
    %v672 = vsel %vm670, %v671, %v669
    %v673 = vrsqrt.pop %v611
    %v674 = vmul.f32 %v611, %v673
    %vm675 = vcmp.eq.f32.partialorder %v611, inf
    %v676 = vsel %vm675, %v611, %v674
    %vm677 = vcmp.eq.f32.partialorder %v611, 0.0
    %v678 = vand.u32 %v611, 2147483648
    %v679 = vsel %vm677, %v678, %v676
    %v680 = vrsqrt.pop %v614
    %v681 = vmul.f32 %v614, %v680
    %vm682 = vcmp.eq.f32.partialorder %v614, inf
    %v683 = vsel %vm682, %v614, %v681
    %vm684 = vcmp.eq.f32.partialorder %v614, 0.0
    %v685 = vand.u32 %v614, 2147483648
    %v686 = vsel %vm684, %v685, %v683
    %v687 = vrsqrt.pop %v617
    %v688 = vmul.f32 %v617, %v687
    %vm689 = vcmp.eq.f32.partialorder %v617, inf
    %v690 = vsel %vm689, %v617, %v688
    %vm691 = vcmp.eq.f32.partialorder %v617, 0.0
    %v692 = vand.u32 %v617, 2147483648
    %v693 = vsel %vm691, %v692, %v690
    %v694 = vrsqrt.pop %v620
    %v695 = vmul.f32 %v620, %v694
    %vm696 = vcmp.eq.f32.partialorder %v620, inf
    %v697 = vsel %vm696, %v620, %v695
    %vm698 = vcmp.eq.f32.partialorder %v620, 0.0
    %v699 = vand.u32 %v620, 2147483648
    %v700 = vsel %vm698, %v699, %v697
    %v701 = vrsqrt.pop %v623
    %v702 = vmul.f32 %v623, %v701
    %vm703 = vcmp.eq.f32.partialorder %v623, inf
    %v704 = vsel %vm703, %v623, %v702
    %vm705 = vcmp.eq.f32.partialorder %v623, 0.0
    %v706 = vand.u32 %v623, 2147483648
    %v707 = vsel %vm705, %v706, %v704
    %v708 = vrsqrt.pop %v626
    %v709 = vmul.f32 %v626, %v708
    %vm710 = vcmp.eq.f32.partialorder %v626, inf
    %v711 = vsel %vm710, %v626, %v709
    %vm712 = vcmp.eq.f32.partialorder %v626, 0.0
    %v713 = vand.u32 %v626, 2147483648
    %v714 = vsel %vm712, %v713, %v711
    %v715 = vrsqrt.pop %v629
    %v716 = vmul.f32 %v629, %v715
    %vm717 = vcmp.eq.f32.partialorder %v629, inf
    %v718 = vsel %vm717, %v629, %v716
    %vm719 = vcmp.eq.f32.partialorder %v629, 0.0
    %v720 = vand.u32 %v629, 2147483648
    %v721 = vsel %vm719, %v720, %v718
    %v722 = vrsqrt.pop %v632
    %v723 = vmul.f32 %v632, %v722
    %vm724 = vcmp.eq.f32.partialorder %v632, inf
    %v725 = vsel %vm724, %v632, %v723
    %vm726 = vcmp.eq.f32.partialorder %v632, 0.0
    %v727 = vand.u32 %v632, 2147483648
    %v728 = vsel %vm726, %v727, %v725
    %v729 = vrsqrt.pop %v635
    %v730 = vmul.f32 %v635, %v729
    %vm731 = vcmp.eq.f32.partialorder %v635, inf
    %v732 = vsel %vm731, %v635, %v730
    %vm733 = vcmp.eq.f32.partialorder %v635, 0.0
    %v734 = vand.u32 %v635, 2147483648
    %v735 = vsel %vm733, %v734, %v732
    %v736 = vrsqrt.pop %v638
    %v737 = vmul.f32 %v638, %v736
    %vm738 = vcmp.eq.f32.partialorder %v638, inf
    %v739 = vsel %vm738, %v638, %v737
    %vm740 = vcmp.eq.f32.partialorder %v638, 0.0
    %v741 = vand.u32 %v638, 2147483648
    %v742 = vsel %vm740, %v741, %v739
    %v743 = vrsqrt.pop %v641
    %v744 = vmul.f32 %v641, %v743
    %vm745 = vcmp.eq.f32.partialorder %v641, inf
    %v746 = vsel %vm745, %v641, %v744
    %vm747 = vcmp.eq.f32.partialorder %v641, 0.0
    %v748 = vand.u32 %v641, 2147483648
    %v749 = vsel %vm747, %v748, %v746
    %v750 = vrsqrt.pop %v644
    %v751 = vmul.f32 %v644, %v750
    %vm752 = vcmp.eq.f32.partialorder %v644, inf
    %v753 = vsel %vm752, %v644, %v751
    %vm754 = vcmp.eq.f32.partialorder %v644, 0.0
    %v755 = vand.u32 %v644, 2147483648
    %v756 = vsel %vm754, %v755, %v753
    %v757 = vmax.f32 %v651, 1e-12
    %v758 = vmax.f32 %v658, 1e-12
    %v759 = vmax.f32 %v665, 1e-12
    %v760 = vmax.f32 %v672, 1e-12
    %v761 = vmax.f32 %v679, 1e-12
    %v762 = vmax.f32 %v686, 1e-12
    %v763 = vmax.f32 %v693, 1e-12
    %v764 = vmax.f32 %v700, 1e-12
    %v765 = vmax.f32 %v707, 1e-12
    %v766 = vmax.f32 %v714, 1e-12
    %v767 = vmax.f32 %v721, 1e-12
    %v768 = vmax.f32 %v728, 1e-12
    %v769 = vmax.f32 %v735, 1e-12
    %v770 = vmax.f32 %v742, 1e-12
    %v771 = vmax.f32 %v749, 1e-12
    %v772 = vmax.f32 %v756, 1e-12
    %v773 = vrcp.pop %v757
    %v774 = vmul.f32 1.0, %v773
    %v775 = vrcp.pop %v758
    %v776 = vmul.f32 1.0, %v775
    %v777 = vrcp.pop %v759
    %v778 = vmul.f32 1.0, %v777
    %v779 = vrcp.pop %v760
    %v780 = vmul.f32 1.0, %v779
    %v781 = vrcp.pop %v761
    %v782 = vmul.f32 1.0, %v781
    %v783 = vrcp.pop %v762
    %v784 = vmul.f32 1.0, %v783
    %v785 = vrcp.pop %v763
    %v786 = vmul.f32 1.0, %v785
    %v787 = vrcp.pop %v764
    %v788 = vmul.f32 1.0, %v787
    %v789 = vrcp.pop %v765
    %v790 = vmul.f32 1.0, %v789
    %v791 = vrcp.pop %v766
    %v792 = vmul.f32 1.0, %v791
    %v793 = vrcp.pop %v767
    %v794 = vmul.f32 1.0, %v793
    %v795 = vrcp.pop %v768
    %v796 = vmul.f32 1.0, %v795
    %v797 = vrcp.pop %v769
    %v798 = vmul.f32 1.0, %v797
    %v799 = vrcp.pop %v770
    %v800 = vmul.f32 1.0, %v799
    %v801 = vrcp.pop %v771
    %v802 = vmul.f32 1.0, %v801
    %v803 = vrcp.pop %v772
    %v804 = vmul.f32 1.0, %v803
    %805 = vrot.lane.b32.xlu0 %v31, 96
    %v806 = vpop.permute.xlu0 %805
    %807 = vrot.lane.b32.xlu0 %v32, 96
    %v808 = vpop.permute.xlu0 %807
    %809 = vrot.lane.b32.xlu0 %v33, 96
    %v810 = vpop.permute.xlu0 %809
    %811 = vrot.lane.b32.xlu0 %v34, 96
    %v812 = vpop.permute.xlu0 %811
    %813 = vrot.lane.b32.xlu0 %v35, 96
    %v814 = vpop.permute.xlu0 %813
    %815 = vrot.lane.b32.xlu0 %v36, 96
    %v816 = vpop.permute.xlu0 %815
    %817 = vrot.lane.b32.xlu0 %v37, 96
    %v818 = vpop.permute.xlu0 %817
    %819 = vrot.lane.b32.xlu0 %v38, 96
    %v820 = vpop.permute.xlu0 %819
    %821 = vrot.lane.b32.xlu0 %v39, 96
    %v822 = vpop.permute.xlu0 %821
    %823 = vrot.lane.b32.xlu0 %v40, 96
    %v824 = vpop.permute.xlu0 %823
    %825 = vrot.lane.b32.xlu0 %v41, 96
    %v826 = vpop.permute.xlu0 %825
    %827 = vrot.lane.b32.xlu0 %v42, 96
    %v828 = vpop.permute.xlu0 %827
    %829 = vrot.lane.b32.xlu0 %v43, 96
    %v830 = vpop.permute.xlu0 %829
    %831 = vrot.lane.b32.xlu0 %v44, 96
    %v832 = vpop.permute.xlu0 %831
    %833 = vrot.lane.b32.xlu0 %v45, 96
    %v834 = vpop.permute.xlu0 %833
    %835 = vrot.lane.b32.xlu0 %v46, 96
    %v836 = vpop.permute.xlu0 %835
    %v837 = vsel %vm17, %v806, 0
    %v839 = vsel %vm17, %v808, 0
    %v841 = vsel %vm17, %v810, 0
    %v843 = vsel %vm17, %v812, 0
    %v845 = vsel %vm17, %v814, 0
    %v847 = vsel %vm17, %v816, 0
    %v849 = vsel %vm17, %v818, 0
    %v851 = vsel %vm17, %v820, 0
    %v853 = vsel %vm17, %v822, 0
    %v855 = vsel %vm17, %v824, 0
    %v857 = vsel %vm17, %v826, 0
    %v859 = vsel %vm17, %v828, 0
    %v861 = vsel %vm17, %v830, 0
    %v863 = vsel %vm17, %v832, 0
    %v865 = vsel %vm17, %v834, 0
    %v867 = vsel %vm17, %v836, 0
    %869 = vmatprep.subr.mxu0 0.0
    %870 = vmatpush1.xpose.msra.mxu0 %v837
    %871 = vmatprep.subr.mxu0 0.0
    %872 = vmatpush1.xpose.msra.mxu0 %v839
    %873 = vmatprep.subr.mxu0 0.0
    %874 = vmatpush1.xpose.msra.mxu0 %v841
    %875 = vmatprep.subr.mxu0 0.0
    %876 = vmatpush1.xpose.msra.mxu0 %v843
    %877 = vmatprep.subr.mxu0 0.0
    %878 = vmatpush1.xpose.msra.mxu0 %v845
    %879 = vmatprep.subr.mxu0 0.0
    %880 = vmatpush1.xpose.msra.mxu0 %v847
    %881 = vmatprep.subr.mxu0 0.0
    %882 = vmatpush1.xpose.msra.mxu0 %v849
    %883 = vmatprep.subr.mxu0 0.0
    %884 = vmatpush1.xpose.msra.mxu0 %v851
    %885 = vmatprep.subr.mxu0 0.0
    %886 = vmatpush1.xpose.msra.mxu0 %v853
    %887 = vmatprep.subr.mxu0 0.0
    %888 = vmatpush1.xpose.msra.mxu0 %v855
    %889 = vmatprep.subr.mxu0 0.0
    %890 = vmatpush1.xpose.msra.mxu0 %v857
    %891 = vmatprep.subr.mxu0 0.0
    %892 = vmatpush1.xpose.msra.mxu0 %v859
    %893 = vmatprep.subr.mxu0 0.0
    %894 = vmatpush1.xpose.msra.mxu0 %v861
    %895 = vmatprep.subr.mxu0 0.0
    %896 = vmatpush1.xpose.msra.mxu0 %v863
    %897 = vmatprep.subr.mxu0 0.0
    %898 = vmatpush1.xpose.msra.mxu0 %v865
    %899 = vmatprep.subr.mxu0 0.0
    %900 = vmatpush1.xpose.msra.mxu0 %v867
    %901 = vmatprep.subr.mxu0 0.0
    %902 = vmatpush1.xpose.msra.mxu0 0.0
    %903 = vmatprep.subr.mxu0 0.0
    %904 = vmatpush1.xpose.msra.mxu0 0.0
    %905 = vmatprep.subr.mxu0 0.0
    %906 = vmatpush1.xpose.msra.mxu0 0.0
    %907 = vmatprep.subr.mxu0 0.0
    %908 = vmatpush1.xpose.msra.mxu0 0.0
    %909 = vmatprep.subr.mxu0 0.0
    %910 = vmatpush1.xpose.msra.mxu0 0.0
    %911 = vmatprep.subr.mxu0 0.0
    %912 = vmatpush1.xpose.msra.mxu0 0.0
    %913 = vmatprep.subr.mxu0 0.0
    %914 = vmatpush1.xpose.msra.mxu0 0.0
    %915 = vmatprep.subr.mxu0 0.0
    %916 = vmatpush1.xpose.msra.mxu0 0.0
    %917 = vmatprep.subr.mxu0 0.0
    %918 = vmatpush1.xpose.msra.mxu0 0.0
    %919 = vmatprep.subr.mxu0 0.0
    %920 = vmatpush1.xpose.msra.mxu0 0.0
    %921 = vmatprep.subr.mxu0 0.0
    %922 = vmatpush1.xpose.msra.mxu0 0.0
    %923 = vmatprep.subr.mxu0 0.0
    %924 = vmatpush1.xpose.msra.mxu0 0.0
    %925 = vmatprep.subr.mxu0 0.0
    %926 = vmatpush1.xpose.msra.mxu0 0.0
    %927 = vmatprep.subr.mxu0 0.0
    %928 = vmatpush1.xpose.msra.mxu0 0.0
    %929 = vmatprep.subr.mxu0 0.0
    %930 = vmatpush1.xpose.msra.mxu0 0.0
    %931 = vmatprep.subr.mxu0 0.0
    %932 = vmatpush1.xpose.msra.mxu0 0.0
    %933 = vmatprep.mubr.f32.mxu0 0.0
    %934 = vmatmul.mubr.f32.gmra.mrb[0].mxu0 %v272
    %v935 = vpop.f32.mrb[0].mxu0
    %v936 = vadd.f32 0.0, %v935
    %v937 = vpop.f32.mrb[0].mxu0
    %938 = vdwg.mxu0
    %v955 = vlaneseq
    %v956 = vshrl.u32 %v955, 7
    %v957 = vsub.s32 %v409, %v956
    %v958 = vrot.slane %v774, %v957
    %v959 = vlaneseq
    %v960 = vshrl.u32 %v959, 7
    %v961 = vsub.s32 %v414, %v960
    %v962 = vrot.slane %v776, %v961
    %v963 = vsel %vm419, %v962, %v958
    %v964 = vlaneseq
    %v965 = vshrl.u32 %v964, 7
    %v966 = vsub.s32 %v421, %v965
    %v967 = vrot.slane %v778, %v966
    %v968 = vsel %vm426, %v967, %v963
    %v969 = vlaneseq
    %v970 = vshrl.u32 %v969, 7
    %v971 = vsub.s32 %v428, %v970
    %v972 = vrot.slane %v780, %v971
    %v973 = vsel %vm433, %v972, %v968
    %v974 = vlaneseq
    %v975 = vshrl.u32 %v974, 7
    %v976 = vsub.s32 %v435, %v975
    %v977 = vrot.slane %v782, %v976
    %v978 = vsel %vm440, %v977, %v973
    %v979 = vlaneseq
    %v980 = vshrl.u32 %v979, 7
    %v981 = vsub.s32 %v442, %v980
    %v982 = vrot.slane %v784, %v981
    %v983 = vsel %vm447, %v982, %v978
    %v984 = vlaneseq
    %v985 = vshrl.u32 %v984, 7
    %v986 = vsub.s32 %v449, %v985
    %v987 = vrot.slane %v786, %v986
    %v988 = vsel %vm454, %v987, %v983
    %v989 = vlaneseq
    %v990 = vshrl.u32 %v989, 7
    %v991 = vsub.s32 %v456, %v990
    %v992 = vrot.slane %v788, %v991
    %v993 = vsel %vm461, %v992, %v988
    %v994 = vlaneseq
    %v995 = vshrl.u32 %v994, 7
    %v996 = vsub.s32 %v463, %v995
    %v997 = vrot.slane %v790, %v996
    %v998 = vsel %vm468, %v997, %v993
    %v999 = vlaneseq
    %v1000 = vshrl.u32 %v999, 7
    %v1001 = vsub.s32 %v470, %v1000
    %v1002 = vrot.slane %v792, %v1001
    %v1003 = vsel %vm475, %v1002, %v998
    %v1004 = vlaneseq
    %v1005 = vshrl.u32 %v1004, 7
    %v1006 = vsub.s32 %v477, %v1005
    %v1007 = vrot.slane %v794, %v1006
    %v1008 = vsel %vm482, %v1007, %v1003
    %v1009 = vlaneseq
    %v1010 = vshrl.u32 %v1009, 7
    %v1011 = vsub.s32 %v484, %v1010
    %v1012 = vrot.slane %v796, %v1011
    %v1013 = vsel %vm489, %v1012, %v1008
    %v1014 = vlaneseq
    %v1015 = vshrl.u32 %v1014, 7
    %v1016 = vsub.s32 %v491, %v1015
    %v1017 = vrot.slane %v798, %v1016
    %v1018 = vsel %vm496, %v1017, %v1013
    %v1019 = vlaneseq
    %v1020 = vshrl.u32 %v1019, 7
    %v1021 = vsub.s32 %v498, %v1020
    %v1022 = vrot.slane %v800, %v1021
    %v1023 = vsel %vm503, %v1022, %v1018
    %v1024 = vlaneseq
    %v1025 = vshrl.u32 %v1024, 7
    %v1026 = vsub.s32 %v505, %v1025
    %v1027 = vrot.slane %v802, %v1026
    %v1028 = vsel %vm510, %v1027, %v1023
    %v1029 = vlaneseq
    %v1030 = vshrl.u32 %v1029, 7
    %v1031 = vsub.s32 %v512, %v1030
    %v1032 = vrot.slane %v804, %v1031
    %v1033 = vsel %vm517, %v1032, %v1028
    %v1034 = vsel %vm519, %v1033, %v1033
    %v1035 = vsel %vm521, %v1033, %v1034
    %v1036 = vsel %vm523, %v1033, %v1035
    %v1037 = vsel %vm525, %v1033, %v1036
    %v1038 = vsel %vm527, %v1033, %v1037
    %v1039 = vsel %vm529, %v1033, %v1038
    %v1041 = vmul.f32 %v936, %v1039
    %v1042 = vmax.f32 %v532, %v1041
    %1043 = vrot.lane.b32.xlu0 %v47, 64
    %v1044 = vpop.permute.xlu0 %1043
    %1045 = vrot.lane.b32.xlu0 %v48, 64
    %v1046 = vpop.permute.xlu0 %1045
    %1047 = vrot.lane.b32.xlu0 %v49, 64
    %v1048 = vpop.permute.xlu0 %1047
    %1049 = vrot.lane.b32.xlu0 %v50, 64
    %v1050 = vpop.permute.xlu0 %1049
    %1051 = vrot.lane.b32.xlu0 %v51, 64
    %v1052 = vpop.permute.xlu0 %1051
    %1053 = vrot.lane.b32.xlu0 %v52, 64
    %v1054 = vpop.permute.xlu0 %1053
    %1055 = vrot.lane.b32.xlu0 %v53, 64
    %v1056 = vpop.permute.xlu0 %1055
    %1057 = vrot.lane.b32.xlu0 %v54, 64
    %v1058 = vpop.permute.xlu0 %1057
    %1059 = vrot.lane.b32.xlu0 %v55, 64
    %v1060 = vpop.permute.xlu0 %1059
    %1061 = vrot.lane.b32.xlu0 %v56, 64
    %v1062 = vpop.permute.xlu0 %1061
    %1063 = vrot.lane.b32.xlu0 %v57, 64
    %v1064 = vpop.permute.xlu0 %1063
    %1065 = vrot.lane.b32.xlu0 %v58, 64
    %v1066 = vpop.permute.xlu0 %1065
    %1067 = vrot.lane.b32.xlu0 %v59, 64
    %v1068 = vpop.permute.xlu0 %1067
    %1069 = vrot.lane.b32.xlu0 %v60, 64
    %v1070 = vpop.permute.xlu0 %1069
    %1071 = vrot.lane.b32.xlu0 %v61, 64
    %v1072 = vpop.permute.xlu0 %1071
    %1073 = vrot.lane.b32.xlu0 %v62, 64
    %v1074 = vpop.permute.xlu0 %1073
    %v1091 = vsel %vm17, %v1044, 0.0
    %1092 = vadd.xlane.f32.xlu0 %v1091
    %v1093 = vpop.xlane.xlu0 %1092
    %v1094 = vsel %vm17, %v1046, 0.0
    %1095 = vadd.xlane.f32.xlu0 %v1094
    %v1096 = vpop.xlane.xlu0 %1095
    %v1097 = vsel %vm17, %v1048, 0.0
    %1098 = vadd.xlane.f32.xlu0 %v1097
    %v1099 = vpop.xlane.xlu0 %1098
    %v1100 = vsel %vm17, %v1050, 0.0
    %1101 = vadd.xlane.f32.xlu0 %v1100
    %v1102 = vpop.xlane.xlu0 %1101
    %v1103 = vsel %vm17, %v1052, 0.0
    %1104 = vadd.xlane.f32.xlu0 %v1103
    %v1105 = vpop.xlane.xlu0 %1104
    %v1106 = vsel %vm17, %v1054, 0.0
    %1107 = vadd.xlane.f32.xlu0 %v1106
    %v1108 = vpop.xlane.xlu0 %1107
    %v1109 = vsel %vm17, %v1056, 0.0
    %1110 = vadd.xlane.f32.xlu0 %v1109
    %v1111 = vpop.xlane.xlu0 %1110
    %v1112 = vsel %vm17, %v1058, 0.0
    %1113 = vadd.xlane.f32.xlu0 %v1112
    %v1114 = vpop.xlane.xlu0 %1113
    %v1115 = vsel %vm17, %v1060, 0.0
    %1116 = vadd.xlane.f32.xlu0 %v1115
    %v1117 = vpop.xlane.xlu0 %1116
    %v1118 = vsel %vm17, %v1062, 0.0
    %1119 = vadd.xlane.f32.xlu0 %v1118
    %v1120 = vpop.xlane.xlu0 %1119
    %v1121 = vsel %vm17, %v1064, 0.0
    %1122 = vadd.xlane.f32.xlu0 %v1121
    %v1123 = vpop.xlane.xlu0 %1122
    %v1124 = vsel %vm17, %v1066, 0.0
    %1125 = vadd.xlane.f32.xlu0 %v1124
    %v1126 = vpop.xlane.xlu0 %1125
    %v1127 = vsel %vm17, %v1068, 0.0
    %1128 = vadd.xlane.f32.xlu0 %v1127
    %v1129 = vpop.xlane.xlu0 %1128
    %v1130 = vsel %vm17, %v1070, 0.0
    %1131 = vadd.xlane.f32.xlu0 %v1130
    %v1132 = vpop.xlane.xlu0 %1131
    %v1133 = vsel %vm17, %v1072, 0.0
    %1134 = vadd.xlane.f32.xlu0 %v1133
    %v1135 = vpop.xlane.xlu0 %1134
    %v1136 = vsel %vm17, %v1074, 0.0
    %1137 = vadd.xlane.f32.xlu0 %v1136
    %v1138 = vpop.xlane.xlu0 %1137
    %v1139 = vrsqrt.pop %v1093
    %v1140 = vmul.f32 %v1093, %v1139
    %vm1141 = vcmp.eq.f32.partialorder %v1093, inf
    %v1142 = vsel %vm1141, %v1093, %v1140
    %vm1143 = vcmp.eq.f32.partialorder %v1093, 0.0
    %v1144 = vand.u32 %v1093, 2147483648
    %v1145 = vsel %vm1143, %v1144, %v1142
    %v1146 = vrsqrt.pop %v1096
    %v1147 = vmul.f32 %v1096, %v1146
    %vm1148 = vcmp.eq.f32.partialorder %v1096, inf
    %v1149 = vsel %vm1148, %v1096, %v1147
    %vm1150 = vcmp.eq.f32.partialorder %v1096, 0.0
    %v1151 = vand.u32 %v1096, 2147483648
    %v1152 = vsel %vm1150, %v1151, %v1149
    %v1153 = vrsqrt.pop %v1099
    %v1154 = vmul.f32 %v1099, %v1153
    %vm1155 = vcmp.eq.f32.partialorder %v1099, inf
    %v1156 = vsel %vm1155, %v1099, %v1154
    %vm1157 = vcmp.eq.f32.partialorder %v1099, 0.0
    %v1158 = vand.u32 %v1099, 2147483648
    %v1159 = vsel %vm1157, %v1158, %v1156
    %v1160 = vrsqrt.pop %v1102
    %v1161 = vmul.f32 %v1102, %v1160
    %vm1162 = vcmp.eq.f32.partialorder %v1102, inf
    %v1163 = vsel %vm1162, %v1102, %v1161
    %vm1164 = vcmp.eq.f32.partialorder %v1102, 0.0
    %v1165 = vand.u32 %v1102, 2147483648
    %v1166 = vsel %vm1164, %v1165, %v1163
    %v1167 = vrsqrt.pop %v1105
    %v1168 = vmul.f32 %v1105, %v1167
    %vm1169 = vcmp.eq.f32.partialorder %v1105, inf
    %v1170 = vsel %vm1169, %v1105, %v1168
    %vm1171 = vcmp.eq.f32.partialorder %v1105, 0.0
    %v1172 = vand.u32 %v1105, 2147483648
    %v1173 = vsel %vm1171, %v1172, %v1170
    %v1174 = vrsqrt.pop %v1108
    %v1175 = vmul.f32 %v1108, %v1174
    %vm1176 = vcmp.eq.f32.partialorder %v1108, inf
    %v1177 = vsel %vm1176, %v1108, %v1175
    %vm1178 = vcmp.eq.f32.partialorder %v1108, 0.0
    %v1179 = vand.u32 %v1108, 2147483648
    %v1180 = vsel %vm1178, %v1179, %v1177
    %v1181 = vrsqrt.pop %v1111
    %v1182 = vmul.f32 %v1111, %v1181
    %vm1183 = vcmp.eq.f32.partialorder %v1111, inf
    %v1184 = vsel %vm1183, %v1111, %v1182
    %vm1185 = vcmp.eq.f32.partialorder %v1111, 0.0
    %v1186 = vand.u32 %v1111, 2147483648
    %v1187 = vsel %vm1185, %v1186, %v1184
    %v1188 = vrsqrt.pop %v1114
    %v1189 = vmul.f32 %v1114, %v1188
    %vm1190 = vcmp.eq.f32.partialorder %v1114, inf
    %v1191 = vsel %vm1190, %v1114, %v1189
    %vm1192 = vcmp.eq.f32.partialorder %v1114, 0.0
    %v1193 = vand.u32 %v1114, 2147483648
    %v1194 = vsel %vm1192, %v1193, %v1191
    %v1195 = vrsqrt.pop %v1117
    %v1196 = vmul.f32 %v1117, %v1195
    %vm1197 = vcmp.eq.f32.partialorder %v1117, inf
    %v1198 = vsel %vm1197, %v1117, %v1196
    %vm1199 = vcmp.eq.f32.partialorder %v1117, 0.0
    %v1200 = vand.u32 %v1117, 2147483648
    %v1201 = vsel %vm1199, %v1200, %v1198
    %v1202 = vrsqrt.pop %v1120
    %v1203 = vmul.f32 %v1120, %v1202
    %vm1204 = vcmp.eq.f32.partialorder %v1120, inf
    %v1205 = vsel %vm1204, %v1120, %v1203
    %vm1206 = vcmp.eq.f32.partialorder %v1120, 0.0
    %v1207 = vand.u32 %v1120, 2147483648
    %v1208 = vsel %vm1206, %v1207, %v1205
    %v1209 = vrsqrt.pop %v1123
    %v1210 = vmul.f32 %v1123, %v1209
    %vm1211 = vcmp.eq.f32.partialorder %v1123, inf
    %v1212 = vsel %vm1211, %v1123, %v1210
    %vm1213 = vcmp.eq.f32.partialorder %v1123, 0.0
    %v1214 = vand.u32 %v1123, 2147483648
    %v1215 = vsel %vm1213, %v1214, %v1212
    %v1216 = vrsqrt.pop %v1126
    %v1217 = vmul.f32 %v1126, %v1216
    %vm1218 = vcmp.eq.f32.partialorder %v1126, inf
    %v1219 = vsel %vm1218, %v1126, %v1217
    %vm1220 = vcmp.eq.f32.partialorder %v1126, 0.0
    %v1221 = vand.u32 %v1126, 2147483648
    %v1222 = vsel %vm1220, %v1221, %v1219
    %v1223 = vrsqrt.pop %v1129
    %v1224 = vmul.f32 %v1129, %v1223
    %vm1225 = vcmp.eq.f32.partialorder %v1129, inf
    %v1226 = vsel %vm1225, %v1129, %v1224
    %vm1227 = vcmp.eq.f32.partialorder %v1129, 0.0
    %v1228 = vand.u32 %v1129, 2147483648
    %v1229 = vsel %vm1227, %v1228, %v1226
    %v1230 = vrsqrt.pop %v1132
    %v1231 = vmul.f32 %v1132, %v1230
    %vm1232 = vcmp.eq.f32.partialorder %v1132, inf
    %v1233 = vsel %vm1232, %v1132, %v1231
    %vm1234 = vcmp.eq.f32.partialorder %v1132, 0.0
    %v1235 = vand.u32 %v1132, 2147483648
    %v1236 = vsel %vm1234, %v1235, %v1233
    %v1237 = vrsqrt.pop %v1135
    %v1238 = vmul.f32 %v1135, %v1237
    %vm1239 = vcmp.eq.f32.partialorder %v1135, inf
    %v1240 = vsel %vm1239, %v1135, %v1238
    %vm1241 = vcmp.eq.f32.partialorder %v1135, 0.0
    %v1242 = vand.u32 %v1135, 2147483648
    %v1243 = vsel %vm1241, %v1242, %v1240
    %v1244 = vrsqrt.pop %v1138
    %v1245 = vmul.f32 %v1138, %v1244
    %vm1246 = vcmp.eq.f32.partialorder %v1138, inf
    %v1247 = vsel %vm1246, %v1138, %v1245
    %vm1248 = vcmp.eq.f32.partialorder %v1138, 0.0
    %v1249 = vand.u32 %v1138, 2147483648
    %v1250 = vsel %vm1248, %v1249, %v1247
    %v1251 = vmax.f32 %v1145, 1e-12
    %v1252 = vmax.f32 %v1152, 1e-12
    %v1253 = vmax.f32 %v1159, 1e-12
    %v1254 = vmax.f32 %v1166, 1e-12
    %v1255 = vmax.f32 %v1173, 1e-12
    %v1256 = vmax.f32 %v1180, 1e-12
    %v1257 = vmax.f32 %v1187, 1e-12
    %v1258 = vmax.f32 %v1194, 1e-12
    %v1259 = vmax.f32 %v1201, 1e-12
    %v1260 = vmax.f32 %v1208, 1e-12
    %v1261 = vmax.f32 %v1215, 1e-12
    %v1262 = vmax.f32 %v1222, 1e-12
    %v1263 = vmax.f32 %v1229, 1e-12
    %v1264 = vmax.f32 %v1236, 1e-12
    %v1265 = vmax.f32 %v1243, 1e-12
    %v1266 = vmax.f32 %v1250, 1e-12
    %v1267 = vrcp.pop %v1251
    %v1268 = vmul.f32 1.0, %v1267
    %v1269 = vrcp.pop %v1252
    %v1270 = vmul.f32 1.0, %v1269
    %v1271 = vrcp.pop %v1253
    %v1272 = vmul.f32 1.0, %v1271
    %v1273 = vrcp.pop %v1254
    %v1274 = vmul.f32 1.0, %v1273
    %v1275 = vrcp.pop %v1255
    %v1276 = vmul.f32 1.0, %v1275
    %v1277 = vrcp.pop %v1256
    %v1278 = vmul.f32 1.0, %v1277
    %v1279 = vrcp.pop %v1257
    %v1280 = vmul.f32 1.0, %v1279
    %v1281 = vrcp.pop %v1258
    %v1282 = vmul.f32 1.0, %v1281
    %v1283 = vrcp.pop %v1259
    %v1284 = vmul.f32 1.0, %v1283
    %v1285 = vrcp.pop %v1260
    %v1286 = vmul.f32 1.0, %v1285
    %v1287 = vrcp.pop %v1261
    %v1288 = vmul.f32 1.0, %v1287
    %v1289 = vrcp.pop %v1262
    %v1290 = vmul.f32 1.0, %v1289
    %v1291 = vrcp.pop %v1263
    %v1292 = vmul.f32 1.0, %v1291
    %v1293 = vrcp.pop %v1264
    %v1294 = vmul.f32 1.0, %v1293
    %v1295 = vrcp.pop %v1265
    %v1296 = vmul.f32 1.0, %v1295
    %v1297 = vrcp.pop %v1266
    %v1298 = vmul.f32 1.0, %v1297
    %1299 = vrot.lane.b32.xlu0 %v31, 64
    %v1300 = vpop.permute.xlu0 %1299
    %1301 = vrot.lane.b32.xlu0 %v32, 64
    %v1302 = vpop.permute.xlu0 %1301
    %1303 = vrot.lane.b32.xlu0 %v33, 64
    %v1304 = vpop.permute.xlu0 %1303
    %1305 = vrot.lane.b32.xlu0 %v34, 64
    %v1306 = vpop.permute.xlu0 %1305
    %1307 = vrot.lane.b32.xlu0 %v35, 64
    %v1308 = vpop.permute.xlu0 %1307
    %1309 = vrot.lane.b32.xlu0 %v36, 64
    %v1310 = vpop.permute.xlu0 %1309
    %1311 = vrot.lane.b32.xlu0 %v37, 64
    %v1312 = vpop.permute.xlu0 %1311
    %1313 = vrot.lane.b32.xlu0 %v38, 64
    %v1314 = vpop.permute.xlu0 %1313
    %1315 = vrot.lane.b32.xlu0 %v39, 64
    %v1316 = vpop.permute.xlu0 %1315
    %1317 = vrot.lane.b32.xlu0 %v40, 64
    %v1318 = vpop.permute.xlu0 %1317
    %1319 = vrot.lane.b32.xlu0 %v41, 64
    %v1320 = vpop.permute.xlu0 %1319
    %1321 = vrot.lane.b32.xlu0 %v42, 64
    %v1322 = vpop.permute.xlu0 %1321
    %1323 = vrot.lane.b32.xlu0 %v43, 64
    %v1324 = vpop.permute.xlu0 %1323
    %1325 = vrot.lane.b32.xlu0 %v44, 64
    %v1326 = vpop.permute.xlu0 %1325
    %1327 = vrot.lane.b32.xlu0 %v45, 64
    %v1328 = vpop.permute.xlu0 %1327
    %1329 = vrot.lane.b32.xlu0 %v46, 64
    %v1330 = vpop.permute.xlu0 %1329
    %v1331 = vsel %vm17, %v1300, 0
    %v1333 = vsel %vm17, %v1302, 0
    %v1335 = vsel %vm17, %v1304, 0
    %v1337 = vsel %vm17, %v1306, 0
    %v1339 = vsel %vm17, %v1308, 0
    %v1341 = vsel %vm17, %v1310, 0
    %v1343 = vsel %vm17, %v1312, 0
    %v1345 = vsel %vm17, %v1314, 0
    %v1347 = vsel %vm17, %v1316, 0
    %v1349 = vsel %vm17, %v1318, 0
    %v1351 = vsel %vm17, %v1320, 0
    %v1353 = vsel %vm17, %v1322, 0
    %v1355 = vsel %vm17, %v1324, 0
    %v1357 = vsel %vm17, %v1326, 0
    %v1359 = vsel %vm17, %v1328, 0
    %v1361 = vsel %vm17, %v1330, 0
    %1363 = vmatprep.subr.mxu0 0.0
    %1364 = vmatpush1.xpose.msra.mxu0 %v1331
    %1365 = vmatprep.subr.mxu0 0.0
    %1366 = vmatpush1.xpose.msra.mxu0 %v1333
    %1367 = vmatprep.subr.mxu0 0.0
    %1368 = vmatpush1.xpose.msra.mxu0 %v1335
    %1369 = vmatprep.subr.mxu0 0.0
    %1370 = vmatpush1.xpose.msra.mxu0 %v1337
    %1371 = vmatprep.subr.mxu0 0.0
    %1372 = vmatpush1.xpose.msra.mxu0 %v1339
    %1373 = vmatprep.subr.mxu0 0.0
    %1374 = vmatpush1.xpose.msra.mxu0 %v1341
    %1375 = vmatprep.subr.mxu0 0.0
    %1376 = vmatpush1.xpose.msra.mxu0 %v1343
    %1377 = vmatprep.subr.mxu0 0.0
    %1378 = vmatpush1.xpose.msra.mxu0 %v1345
    %1379 = vmatprep.subr.mxu0 0.0
    %1380 = vmatpush1.xpose.msra.mxu0 %v1347
    %1381 = vmatprep.subr.mxu0 0.0
    %1382 = vmatpush1.xpose.msra.mxu0 %v1349
    %1383 = vmatprep.subr.mxu0 0.0
    %1384 = vmatpush1.xpose.msra.mxu0 %v1351
    %1385 = vmatprep.subr.mxu0 0.0
    %1386 = vmatpush1.xpose.msra.mxu0 %v1353
    %1387 = vmatprep.subr.mxu0 0.0
    %1388 = vmatpush1.xpose.msra.mxu0 %v1355
    %1389 = vmatprep.subr.mxu0 0.0
    %1390 = vmatpush1.xpose.msra.mxu0 %v1357
    %1391 = vmatprep.subr.mxu0 0.0
    %1392 = vmatpush1.xpose.msra.mxu0 %v1359
    %1393 = vmatprep.subr.mxu0 0.0
    %1394 = vmatpush1.xpose.msra.mxu0 %v1361
    %1395 = vmatprep.subr.mxu0 0.0
    %1396 = vmatpush1.xpose.msra.mxu0 0.0
    %1397 = vmatprep.subr.mxu0 0.0
    %1398 = vmatpush1.xpose.msra.mxu0 0.0
    %1399 = vmatprep.subr.mxu0 0.0
    %1400 = vmatpush1.xpose.msra.mxu0 0.0
    %1401 = vmatprep.subr.mxu0 0.0
    %1402 = vmatpush1.xpose.msra.mxu0 0.0
    %1403 = vmatprep.subr.mxu0 0.0
    %1404 = vmatpush1.xpose.msra.mxu0 0.0
    %1405 = vmatprep.subr.mxu0 0.0
    %1406 = vmatpush1.xpose.msra.mxu0 0.0
    %1407 = vmatprep.subr.mxu0 0.0
    %1408 = vmatpush1.xpose.msra.mxu0 0.0
    %1409 = vmatprep.subr.mxu0 0.0
    %1410 = vmatpush1.xpose.msra.mxu0 0.0
    %1411 = vmatprep.subr.mxu0 0.0
    %1412 = vmatpush1.xpose.msra.mxu0 0.0
    %1413 = vmatprep.subr.mxu0 0.0
    %1414 = vmatpush1.xpose.msra.mxu0 0.0
    %1415 = vmatprep.subr.mxu0 0.0
    %1416 = vmatpush1.xpose.msra.mxu0 0.0
    %1417 = vmatprep.subr.mxu0 0.0
    %1418 = vmatpush1.xpose.msra.mxu0 0.0
    %1419 = vmatprep.subr.mxu0 0.0
    %1420 = vmatpush1.xpose.msra.mxu0 0.0
    %1421 = vmatprep.subr.mxu0 0.0
    %1422 = vmatpush1.xpose.msra.mxu0 0.0
    %1423 = vmatprep.subr.mxu0 0.0
    %1424 = vmatpush1.xpose.msra.mxu0 0.0
    %1425 = vmatprep.subr.mxu0 0.0
    %1426 = vmatpush1.xpose.msra.mxu0 0.0
    %1427 = vmatprep.mubr.f32.mxu0 0.0
    %1428 = vmatmul.mubr.f32.gmra.mrb[0].mxu0 %v272
    %v1429 = vpop.f32.mrb[0].mxu0
    %v1430 = vadd.f32 0.0, %v1429
    %v1431 = vpop.f32.mrb[0].mxu0
    %1432 = vdwg.mxu0
    %v1449 = vlaneseq
    %v1450 = vshrl.u32 %v1449, 7
    %v1451 = vsub.s32 %v409, %v1450
    %v1452 = vrot.slane %v1268, %v1451
    %v1453 = vlaneseq
    %v1454 = vshrl.u32 %v1453, 7
    %v1455 = vsub.s32 %v414, %v1454
    %v1456 = vrot.slane %v1270, %v1455
    %v1457 = vsel %vm419, %v1456, %v1452
    %v1458 = vlaneseq
    %v1459 = vshrl.u32 %v1458, 7
    %v1460 = vsub.s32 %v421, %v1459
    %v1461 = vrot.slane %v1272, %v1460
    %v1462 = vsel %vm426, %v1461, %v1457
    %v1463 = vlaneseq
    %v1464 = vshrl.u32 %v1463, 7
    %v1465 = vsub.s32 %v428, %v1464
    %v1466 = vrot.slane %v1274, %v1465
    %v1467 = vsel %vm433, %v1466, %v1462
    %v1468 = vlaneseq
    %v1469 = vshrl.u32 %v1468, 7
    %v1470 = vsub.s32 %v435, %v1469
    %v1471 = vrot.slane %v1276, %v1470
    %v1472 = vsel %vm440, %v1471, %v1467
    %v1473 = vlaneseq
    %v1474 = vshrl.u32 %v1473, 7
    %v1475 = vsub.s32 %v442, %v1474
    %v1476 = vrot.slane %v1278, %v1475
    %v1477 = vsel %vm447, %v1476, %v1472
    %v1478 = vlaneseq
    %v1479 = vshrl.u32 %v1478, 7
    %v1480 = vsub.s32 %v449, %v1479
    %v1481 = vrot.slane %v1280, %v1480
    %v1482 = vsel %vm454, %v1481, %v1477
    %v1483 = vlaneseq
    %v1484 = vshrl.u32 %v1483, 7
    %v1485 = vsub.s32 %v456, %v1484
    %v1486 = vrot.slane %v1282, %v1485
    %v1487 = vsel %vm461, %v1486, %v1482
    %v1488 = vlaneseq
    %v1489 = vshrl.u32 %v1488, 7
    %v1490 = vsub.s32 %v463, %v1489
    %v1491 = vrot.slane %v1284, %v1490
    %v1492 = vsel %vm468, %v1491, %v1487
    %v1493 = vlaneseq
    %v1494 = vshrl.u32 %v1493, 7
    %v1495 = vsub.s32 %v470, %v1494
    %v1496 = vrot.slane %v1286, %v1495
    %v1497 = vsel %vm475, %v1496, %v1492
    %v1498 = vlaneseq
    %v1499 = vshrl.u32 %v1498, 7
    %v1500 = vsub.s32 %v477, %v1499
    %v1501 = vrot.slane %v1288, %v1500
    %v1502 = vsel %vm482, %v1501, %v1497
    %v1503 = vlaneseq
    %v1504 = vshrl.u32 %v1503, 7
    %v1505 = vsub.s32 %v484, %v1504
    %v1506 = vrot.slane %v1290, %v1505
    %v1507 = vsel %vm489, %v1506, %v1502
    %v1508 = vlaneseq
    %v1509 = vshrl.u32 %v1508, 7
    %v1510 = vsub.s32 %v491, %v1509
    %v1511 = vrot.slane %v1292, %v1510
    %v1512 = vsel %vm496, %v1511, %v1507
    %v1513 = vlaneseq
    %v1514 = vshrl.u32 %v1513, 7
    %v1515 = vsub.s32 %v498, %v1514
    %v1516 = vrot.slane %v1294, %v1515
    %v1517 = vsel %vm503, %v1516, %v1512
    %v1518 = vlaneseq
    %v1519 = vshrl.u32 %v1518, 7
    %v1520 = vsub.s32 %v505, %v1519
    %v1521 = vrot.slane %v1296, %v1520
    %v1522 = vsel %vm510, %v1521, %v1517
    %v1523 = vlaneseq
    %v1524 = vshrl.u32 %v1523, 7
    %v1525 = vsub.s32 %v512, %v1524
    %v1526 = vrot.slane %v1298, %v1525
    %v1527 = vsel %vm517, %v1526, %v1522
    %v1528 = vsel %vm519, %v1527, %v1527
    %v1529 = vsel %vm521, %v1527, %v1528
    %v1530 = vsel %vm523, %v1527, %v1529
    %v1531 = vsel %vm525, %v1527, %v1530
    %v1532 = vsel %vm527, %v1527, %v1531
    %v1533 = vsel %vm529, %v1527, %v1532
    %v1535 = vmul.f32 %v1430, %v1533
    %v1536 = vmax.f32 %v1042, %v1535
    %v1537 = vmul.f32 %v1536, %v30
    %v1538 = vmul.f32 %v1537, %v1537
    %v1539 = vsub.f32 1.0, %v1538
    %v1540 = vmax.f32 %v1539, 0.0
    %v1541 = vmin.f32 %v1540, 1.0
    %v1542 = vrsqrt.pop %v1541
    %v1543 = vmul.f32 %v1541, %v1542
    %vm1544 = vcmp.eq.f32.partialorder %v1541, inf
    %v1545 = vsel %vm1544, %v1541, %v1543
    %vm1546 = vcmp.eq.f32.partialorder %v1541, 0.0
    %v1547 = vand.u32 %v1541, 2147483648
    %v1548 = vsel %vm1546, %v1547, %v1545
    %v1549 = vmul.f32 %v1537, 0.87758255
    %v1550 = vmul.f32 %v1548, 0.47942555
    %v1551 = vsub.f32 %v1549, %v1550
    %vm1552 = vcmp.gt.f32.partialorder %v1537, -0.87758255
    %v1553 = vsub.f32 %v1537, 0.23971277
    %v1554 = vsel %vm1552, %v1551, %v1553
    %v1555 = vld [vmem:[%s2] sm:$0xff]
    %s1556 = smul.u32 0, 128
    %v1557 = vstv %s1556
    %v1558 = vadd.s32 %v409, %v1557
    %1559 = vset.pattern.permute.xlu0 0
    %1560 = vperm.xlu0 %1559, %v1555
    %v1561 = vpop.permute.xlu0 %1560
    %vm1562 = vcmp.eq.s32.totalorder %v1558, %v1561
    %v1563 = vsel %vm1562, 1, 0
    %v1564 = vcvt.s32.f32 %v1563
    %v1565 = vmul.f32 %v1564, %v1554
    %v1566 = vsub.f32 1.0, %v1564
    %v1567 = vmul.f32 %v1566, %v1537
    %v1568 = vadd.f32 %v1565, %v1567
    %v1569 = vmul.f32 %v1568, 30.0
    %1570 = vst [vmem:[#allocation2] sm:$0xff] %v1569
    // Predicated region
    $region14: #{tpu_custom_call.1} parent=1 // pred_check
      _
    $region15: #{tpu_custom_call.1} parent=1 // pred_check_branch
      %1572 = sbr.rel (0) target = $region17
    $region16: #{tpu_custom_call.1} parent=1 // pred_region
      %s1574 = ssub.s32 128, 128
      %1575 = vsyncadd [#allocation3], %s1574
      %s1577 = sshll.u32 [#allocation2], 4
      %s1578 = int_to_ptr.vmem [resolvable:$true] %s1577
      %1580 = dma.vmem_to_hbm [thread:$0]  %s1578, 128, %s3, [#allocation3]
    $region17: #{tpu_custom_call.1} parent=1 // pred_fallthru
      _
    // Predicated region
    $region18: #{tpu_custom_call.1} parent=1 // pred_check
      _
    $region19: #{tpu_custom_call.1} parent=1 // pred_check_branch
      %1582 = sbr.rel (0) target = $region21
    $region20: #{tpu_custom_call.1} parent=1 // pred_region
      %1583 = dma.done [#allocation3], 128
    $region21: #{tpu_custom_call.1} parent=1 // pred_fallthru
      _
    %1584 = vsyncpa [#allocation3], 1

</llo_original>
